<compile_context>
chip_gen: v6e
topology: v6e:2x2x1
jax: 0.10.0
libtpu: 0.0.40
codegen_flags: <defaults>
</compile_context>

<pallas_src>
import functools

import jax
import jax.numpy as jnp
from jax.experimental import pallas as pl
from jax.experimental.pallas import tpu as pltpu


def gmf_kernel(uid_ref, iid_ref, tab_ref, b_ref, out_ref, *, nu_pad):
    # uid_ref, iid_ref : (1, 1, tb) int32 — batch tile of user / item ids
    # tab_ref          : (2F, K) f32     — block-diag [[w*utab^T, 0],[0, itab^T]]
    # b_ref            : (1, 1) f32      — affine bias (SMEM scalar)
    # out_ref          : (1, 1, tb) f32  — ratings for this tile (lane dense)
    tb = out_ref.shape[2]
    two_f, k_dim = tab_ref.shape
    f = two_f // 2

    uid = uid_ref[0]                                    # (1, tb) int32
    iid = iid_ref[0]                                    # (1, tb) int32

    # Single sublane-varying iota shared by both one-hot halves.
    row = jax.lax.broadcasted_iota(jnp.int32, (k_dim, tb), 0)
    # Column j has ones at row uid[j] (user range, < nu_pad) and at row
    # iid[j] + nu_pad (item range).  ids are < their table sizes, so the two
    # compares cannot both hit the same row.
    oh = jnp.logical_or(row == uid, row == iid + nu_pad).astype(jnp.float32)

    # One fused MXU gather: rows [:F] = weight-scaled user emb, rows [F:] = item emb.
    emb = jnp.dot(tab_ref[...], oh, preferred_element_type=jnp.float32)   # (2F, tb)

    mf = emb[:f, :] * emb[f:, :]                        # (F, tb); w already folded in
    logits = jnp.sum(mf, axis=0, keepdims=True) + b_ref[0, 0]             # (1, tb)

    # Sigmoid: exp on the EUP; exact reciprocal on a single (1, tb) row is cheap.
    out_ref[0] = 1.0 / (1.0 + jnp.exp(-logits))


def _round_up(x, m):
    return (x + m - 1) // m * m


def prepare_gmf(params):
    """One-off preprocessing: fold affine weight, transpose/pad tables, fuse
    them into a single block-diagonal [2F, nu_pad + ni_pad] matrix."""
    utab = params["embed_user_mf"]        # [NU, F]
    itab = params["embed_item_mf"]        # [NI, F]
    w = params["affine_w"]                # [1, F]
    b = params["affine_b"]                # [1, 1]

    nu, f = utab.shape
    ni, _ = itab.shape
    nu_pad = _round_up(nu, 128)
    ni_pad = _round_up(ni, 128)

    # Fold the Linear weight into the user table, transpose to [F, N_pad].
    utab_t = jnp.pad((utab * w).T.astype(jnp.float32), ((0, 0), (0, nu_pad - nu)))
    itab_t = jnp.pad(itab.T.astype(jnp.float32), ((0, 0), (0, ni_pad - ni)))

    top = jnp.concatenate([utab_t, jnp.zeros((f, ni_pad), jnp.float32)], axis=1)
    bot = jnp.concatenate([jnp.zeros((f, nu_pad), jnp.float32), itab_t], axis=1)
    table = jnp.concatenate([top, bot], axis=0)         # [2F, nu_pad + ni_pad]

    return {"table": table, "bias": b.astype(jnp.float32), "nu_pad": nu_pad}


def gmf_forward(user, item, prepared, *, tb=None, tb_max=4096):
    """user, item: int [B]; returns f32 [B] ratings."""
    table = prepared["table"]
    bias = prepared["bias"]
    nu_pad = prepared["nu_pad"]
    two_f, k_dim = table.shape

    B = user.shape[0]
    if tb is None:
        # Fewest grid steps possible (step overhead dominates), capped so the
        # (K, tb) one-hot + iota intermediates stay VMEM-safe on v7x.
        tb = min(_round_up(B, 128), tb_max)
    assert tb % 128 == 0, "tb must be a multiple of 128 for lane-dense tiles"

    num_tiles = pl.cdiv(B, tb)
    b_pad = num_tiles * tb

    # Pad the batch with a valid index (0); padded outputs are sliced off.
    uid = jnp.pad(user.astype(jnp.int32), (0, b_pad - B)).reshape(num_tiles, 1, tb)
    iid = jnp.pad(item.astype(jnp.int32), (0, b_pad - B)).reshape(num_tiles, 1, tb)

    kernel = functools.partial(gmf_kernel, nu_pad=nu_pad)

    out = pl.pallas_call(
        kernel,
        out_shape=jax.ShapeDtypeStruct((num_tiles, 1, tb), jnp.float32),
        grid_spec=pltpu.PrefetchScalarGridSpec(
            num_scalar_prefetch=0,
            grid=(num_tiles,),
            in_specs=[
                pl.BlockSpec((1, 1, tb), lambda i: (i, 0, 0)),      # user id tile
                pl.BlockSpec((1, 1, tb), lambda i: (i, 0, 0)),      # item id tile
                pl.BlockSpec((two_f, k_dim), lambda i: (0, 0)),     # fused table (resident)
                pl.BlockSpec((1, 1), lambda i: (0, 0),
                             memory_space=pltpu.MemorySpace.SMEM),  # bias scalar
            ],
            out_specs=pl.BlockSpec((1, 1, tb), lambda i: (i, 0, 0)),
        ),
        compiler_params=pltpu.CompilerParams(
            dimension_semantics=("parallel",)),
    )(uid, iid, table, bias)

    return out.reshape(b_pad)[:B]          # matches rating.squeeze()


def init_params(key, num_users, num_items, num_factors):
    k1, k2, k3 = jax.random.split(key, 3)
    # nn.init.normal_(std=0.01)
    embed_user = 0.01 * jax.random.normal(k1, (num_users, num_factors), jnp.float32)
    embed_item = 0.01 * jax.random.normal(k2, (num_items, num_factors), jnp.float32)
    # xavier_uniform_ for Linear(num_factors -> 1): bound = sqrt(6/(fan_in+fan_out))
    bound = (6.0 / (num_factors + 1)) ** 0.5
    affine_w = jax.random.uniform(k3, (1, num_factors), jnp.float32, -bound, bound)
    affine_b = jnp.zeros((1, 1), jnp.float32)
    return {
        "embed_user_mf": embed_user,
        "embed_item_mf": embed_item,
        "affine_w": affine_w,
        "affine_b": affine_b,
    }


def gmf_reference(user, item, params):
    u_emb = jnp.take(params["embed_user_mf"], user, axis=0)
    i_emb = jnp.take(params["embed_item_mf"], item, axis=0)
    mf = u_emb * i_emb
    logits = mf @ params["affine_w"].T + params["affine_b"][0, 0]
    return jax.nn.sigmoid(logits).squeeze(-1)


if __name__ == "__main__":
    num_users, num_items, num_factors = 50, 40, 32
    batch = 1000   # not a multiple of 128 -> exercises padded tail

    key = jax.random.PRNGKey(0)
    kp, ku, ki = jax.random.split(key, 3)
    params = init_params(kp, num_users, num_items, num_factors)
    prepared = prepare_gmf(params)

    user = jax.random.randint(ku, (batch,), 0, num_users, dtype=jnp.int32)
    item = jax.random.randint(ki, (batch,), 0, num_items, dtype=jnp.int32)

    ref = gmf_reference(user, item, params)

    # Default tiling: one 1024-wide tile covers the whole batch (1 grid step).
    rating = gmf_forward(user, item, prepared)
    rating = jax.block_until_ready(rating)
    assert rating.shape == (batch,)
    assert jnp.allclose(rating, ref, atol=1e-6, rtol=1e-5), (rating, ref)

    # Small explicit tile: exercises the multi-tile grid / padded tail path.
    rating_multi = gmf_forward(user, item, prepared, tb=256)
    rating_multi = jax.block_until_ready(rating_multi)
    assert jnp.allclose(rating_multi, ref, atol=1e-6, rtol=1e-5), (rating_multi, ref)

    print("KERNEL_OK")
</pallas_src>

<mosaic_0001>
module attributes {stable_mosaic.version = 11 : i64} {
  func.func @gmf_kernel(%arg0: i32, %arg1: memref<1x1x1024xi32, #tpu.memory_space<vmem>>, %arg2: memref<1x1x1024xi32, #tpu.memory_space<vmem>>, %arg3: memref<64x256xf32, #tpu.memory_space<vmem>>, %arg4: memref<1x1xf32, #tpu.memory_space<smem>>, %arg5: memref<1x1x1024xf32, #tpu.memory_space<vmem>>) attributes {dimension_semantics = [#tpu.dimension_semantics<parallel>], iteration_bounds = array<i64: 1>, scalar_prefetch = 0 : i64, scratch_operands = 0 : i64, tpu.core_type = #tpu.core_type<tc>, window_params = [{transform_indices = @transform_0, window_bounds = array<i64: 1, 1, 1024>}, {transform_indices = @transform_1, window_bounds = array<i64: 1, 1, 1024>}, {pipeline_mode = #tpu.pipeline_mode<synchronous>, transform_indices = @transform_2, window_bounds = array<i64: 64, 256>}, {transform_indices = @transform_3, window_bounds = array<i64: 1, 1>}, {transform_indices = @transform_4, window_bounds = array<i64: 1, 1, 1024>}]} {
    %c0 = arith.constant 0 : index
    %c0_0 = arith.constant 0 : index
    %c0_1 = arith.constant 0 : index
    %0 = vector.load %arg1[%c0, %c0_0, %c0_1] : memref<1x1x1024xi32, #tpu.memory_space<vmem>>, vector<1x1x1024xi32>
    %1 = vector.shape_cast %0 : vector<1x1x1024xi32> to vector<1x1024xi32>
    %c0_2 = arith.constant 0 : index
    %c0_3 = arith.constant 0 : index
    %c0_4 = arith.constant 0 : index
    %2 = vector.load %arg2[%c0_2, %c0_3, %c0_4] : memref<1x1x1024xi32, #tpu.memory_space<vmem>>, vector<1x1x1024xi32>
    %3 = vector.shape_cast %2 : vector<1x1x1024xi32> to vector<1x1024xi32>
    %4 = tpu.iota {dimensions = array<i32: 0>} : vector<256x1024xi32>
    %5 = vector.broadcast %1 : vector<1x1024xi32> to vector<256x1024xi32>
    %6 = arith.cmpi eq, %4, %5 : vector<256x1024xi32>
    %c128_i32 = arith.constant 128 : i32
    %7 = vector.broadcast %c128_i32 : i32 to vector<1x1024xi32>
    %8 = arith.addi %3, %7 : vector<1x1024xi32>
    %9 = vector.broadcast %8 : vector<1x1024xi32> to vector<256x1024xi32>
    %10 = arith.cmpi eq, %4, %9 : vector<256x1024xi32>
    %11 = arith.ori %6, %10 : vector<256x1024xi1>
    %12 = arith.extui %11 : vector<256x1024xi1> to vector<256x1024xi32>
    %13 = arith.sitofp %12 : vector<256x1024xi32> to vector<256x1024xf32>
    %c0_5 = arith.constant 0 : index
    %c0_6 = arith.constant 0 : index
    %14 = vector.load %arg3[%c0_5, %c0_6] : memref<64x256xf32, #tpu.memory_space<vmem>>, vector<64x256xf32>
    %cst = arith.constant dense<0.000000e+00> : vector<64x1024xf32>
    %15 = tpu.matmul %14, %13, %cst {dimension_numbers = #tpu.dot_dimension_numbers<[1], [0], [0], [1], [0, 0, 1, 1], [], []>} : vector<64x256xf32>, vector<256x1024xf32>, vector<64x1024xf32> -> vector<64x1024xf32>
    %16 = vector.extract_strided_slice %15 {offsets = [0, 0], sizes = [32, 1024], strides = [1, 1]} : vector<64x1024xf32> to vector<32x1024xf32>
    %17 = vector.extract_strided_slice %15 {offsets = [32, 0], sizes = [32, 1024], strides = [1, 1]} : vector<64x1024xf32> to vector<32x1024xf32>
    %18 = arith.mulf %16, %17 : vector<32x1024xf32>
    %cst_7 = arith.constant dense<0.000000e+00> : vector<1024xf32>
    %19 = vector.multi_reduction <add>, %18, %cst_7 [0] : vector<32x1024xf32> to vector<1024xf32>
    %20 = vector.shape_cast %19 : vector<1024xf32> to vector<1x1024xf32>
    %c0_8 = arith.constant 0 : index
    %c0_9 = arith.constant 0 : index
    %21 = memref.load %arg4[%c0_8, %c0_9] : memref<1x1xf32, #tpu.memory_space<smem>>
    %22 = vector.broadcast %21 : f32 to vector<1x1024xf32>
    %23 = arith.addf %20, %22 : vector<1x1024xf32>
    %cst_10 = arith.constant 0.000000e+00 : f32
    %24 = vector.broadcast %cst_10 : f32 to vector<1x1024xf32>
    %25 = arith.subf %24, %23 : vector<1x1024xf32>
    %26 = math.exp %25 : vector<1x1024xf32>
    %cst_11 = arith.constant 1.000000e+00 : f32
    %27 = vector.broadcast %cst_11 : f32 to vector<1x1024xf32>
    %28 = arith.addf %27, %26 : vector<1x1024xf32>
    %cst_12 = arith.constant 1.000000e+00 : f32
    %29 = vector.broadcast %cst_12 : f32 to vector<1x1024xf32>
    %30 = arith.divf %29, %28 : vector<1x1024xf32>
    %c0_13 = arith.constant 0 : index
    %c0_14 = arith.constant 0 : index
    %c0_15 = arith.constant 0 : index
    %31 = vector.load %arg5[%c0_13, %c0_14, %c0_15] : memref<1x1x1024xf32, #tpu.memory_space<vmem>>, vector<1x1x1024xf32>
    %32 = vector.shape_cast %31 : vector<1x1x1024xf32> to vector<1x1024xf32>
    %33 = vector.shape_cast %30 : vector<1x1024xf32> to vector<1x1x1024xf32>
    tpu.vector_store %arg5[%c0_13, %c0_14, %c0_15], %33 {strides = array<i32>} : memref<1x1x1024xf32, #tpu.memory_space<vmem>>, vector<1x1x1024xf32>,
    return
  }
  func.func @transform_0(%arg0: i32) -> (i32, i32, i32) {
    %c0_i32 = arith.constant 0 : i32
    %c0_i32_0 = arith.constant 0 : i32
    %c0_i32_1 = arith.constant 0 : i32
    return %arg0, %c0_i32, %c0_i32_0 : i32, i32, i32
  }
  func.func @transform_1(%arg0: i32) -> (i32, i32, i32) {
    %c0_i32 = arith.constant 0 : i32
    %c0_i32_0 = arith.constant 0 : i32
    %c0_i32_1 = arith.constant 0 : i32
    return %arg0, %c0_i32, %c0_i32_0 : i32, i32, i32
  }
  func.func @transform_2(%arg0: i32) -> (i32, i32) {
    %c0_i32 = arith.constant 0 : i32
    %c0_i32_0 = arith.constant 0 : i32
    %c0_i32_1 = arith.constant 0 : i32
    return %c0_i32, %c0_i32_0 : i32, i32
  }
  func.func @transform_3(%arg0: i32) -> (i32, i32) {
    %c0_i32 = arith.constant 0 : i32
    %c0_i32_0 = arith.constant 0 : i32
    %c0_i32_1 = arith.constant 0 : i32
    return %c0_i32, %c0_i32_0 : i32, i32
  }
  func.func @transform_4(%arg0: i32) -> (i32, i32, i32) {
    %c0_i32 = arith.constant 0 : i32
    %c0_i32_0 = arith.constant 0 : i32
    %c0_i32_1 = arith.constant 0 : i32
    return %arg0, %c0_i32, %c0_i32_0 : i32, i32, i32
  }
}

</mosaic_0001>

<llo_original>
// kernel: tpu_custom_call.1
$region0: #{tpu_custom_call.1}
  #allocation0 [shape = 'u32[]', space=smem, size = 0x4, offset = 0x4, fixed_abs, tag = 'smem constant byte address 0x4 - core index']
  #allocation1 [shape = 'u32[144,128]{1,0:T(1,128)}', space=vmem, size = 0x12000, scoped, tag = 'internal scratch']
  #allocation2 [shape = 'f32[1,1]{1,0:T(1,128)S(6)}', space=smem, size = 0x200, scoped, tag = 'scoped memory for tpu_custom_call.1']
  %s0 = inlined_call_operand.hbm [shape: s32[1,1,1024], index: 0, kind: input, shape index: {}]
  %s1 = inlined_call_operand.hbm [shape: s32[1,1,1024], index: 1, kind: input, shape index: {}]
  %s2 = inlined_call_operand.hbm [shape: f32[64,256], index: 2, kind: input, shape index: {}]
  %s3 = inlined_call_operand.<no memory space> [shape: f32[1,1], index: 3, kind: input, shape index: {}]
  %s4 = inlined_call_operand.hbm [shape: f32[1,1,1024], index: 4, kind: output, shape index: {}]
  %s5 = sld [smem:[#allocation0]]
  $region38: #{tpu_custom_call.1} parent=0
    _
  %s7 = ssub.s32 1, %s5
  %s8 = scalar_select 0, %s7, %s5
  %9 = sst [smem:[#allocation2]] %s3
  $region1: #{tpu_custom_call.1} parent=0
    #allocation3 [shape = 'u8[4096]{0}', space=vmem, size = 0x1000, scoped, tag = 'input window, operand 0, single buffered']
    #allocation4 [shape = 's32[1]{0}', space=sflag, size = 0x4, scoped, tag = 'scoped memory for tpu_custom_call.1']
    #allocation5 [shape = 's32[1]{0}', space=sflag, size = 0x4, scoped, tag = 'scoped memory for tpu_custom_call.1']
    #allocation6 [shape = 'u8[4096]{0}', space=vmem, size = 0x1000, scoped, tag = 'input window, operand 1, single buffered']
    #allocation7 [shape = 's32[1]{0}', space=sflag, size = 0x4, scoped, tag = 'scoped memory for tpu_custom_call.1']
    #allocation8 [shape = 'u8[65536]{0}', space=vmem, size = 0x10000, scoped, tag = 'input window, operand 2, single buffered']
    #allocation9 [shape = 'u8[4096]{0}', space=vmem, size = 0x1000, scoped, tag = 'output window, operand 0, single buffered']
    %10 = vsyncpa [#allocation4], 0
    %11 = vsyncpa [#allocation7], 0
    %12 = vsyncpa [#allocation5], 0
    // Predicated region
    $region2: #{tpu_custom_call.1} parent=1 // pred_check
      _
    $region3: #{tpu_custom_call.1} parent=1 // pred_check_branch
      %14 = sbr.rel (0) target = $region5
    $region4: #{tpu_custom_call.1} parent=1 // pred_region
      %s16 = ssub.s32 128, 128
      %17 = vsyncadd [#allocation4], %s16
      %s19 = sshll.u32 [#allocation3], 4
      %s20 = int_to_ptr.vmem [resolvable:$true] %s19
      %22 = dma.hbm_to_vmem [thread:$0]  %s0, 128, %s20, [#allocation4]
    $region5: #{tpu_custom_call.1} parent=1 // pred_fallthru
      _
    // Predicated region
    $region6: #{tpu_custom_call.1} parent=1 // pred_check
      _
    $region7: #{tpu_custom_call.1} parent=1 // pred_check_branch
      %24 = sbr.rel (0) target = $region9
    $region8: #{tpu_custom_call.1} parent=1 // pred_region
      %s26 = ssub.s32 128, 128
      %27 = vsyncadd [#allocation7], %s26
      %s29 = sshll.u32 [#allocation6], 4
      %s30 = int_to_ptr.vmem [resolvable:$true] %s29
      %32 = dma.hbm_to_vmem [thread:$0]  %s1, 128, %s30, [#allocation7]
    $region9: #{tpu_custom_call.1} parent=1 // pred_fallthru
      _
    // Predicated region
    $region10: #{tpu_custom_call.1} parent=1 // pred_check
      _
    $region11: #{tpu_custom_call.1} parent=1 // pred_check_branch
      %34 = sbr.rel (0) target = $region13
    $region12: #{tpu_custom_call.1} parent=1 // pred_region
      %s36 = ssub.s32 2048, 2048
      %37 = vsyncadd [#allocation7], %s36
      %s38 = sshll.u32 [#allocation8], 4
      %s39 = int_to_ptr.vmem [resolvable:$true] %s38
      %44 = dma.hbm_to_vmem [thread:$0]  %s2, 2048, %s39, [#allocation7], 256, 256, 16
    $region13: #{tpu_custom_call.1} parent=1 // pred_fallthru
      _
    // Predicated region
    $region14: #{tpu_custom_call.1} parent=1 // pred_check
      _
    $region15: #{tpu_custom_call.1} parent=1 // pred_check_branch
      %46 = sbr.rel (0) target = $region17
    $region16: #{tpu_custom_call.1} parent=1 // pred_region
      _
    $region17: #{tpu_custom_call.1} parent=1 // pred_fallthru
      _
    // Predicated region
    $region18: #{tpu_custom_call.1} parent=1 // pred_check
      _
    $region19: #{tpu_custom_call.1} parent=1 // pred_check_branch
      %48 = sbr.rel (0) target = $region21
    $region20: #{tpu_custom_call.1} parent=1 // pred_region
      %49 = dma.done [#allocation4], 128
    $region21: #{tpu_custom_call.1} parent=1 // pred_fallthru
      _
    // Predicated region
    $region22: #{tpu_custom_call.1} parent=1 // pred_check
      _
    $region23: #{tpu_custom_call.1} parent=1 // pred_check_branch
      %51 = sbr.rel (0) target = $region25
    $region24: #{tpu_custom_call.1} parent=1 // pred_region
      %52 = dma.done [#allocation7], 128
    $region25: #{tpu_custom_call.1} parent=1 // pred_fallthru
      _
    // Predicated region
    $region26: #{tpu_custom_call.1} parent=1 // pred_check
      _
    $region27: #{tpu_custom_call.1} parent=1 // pred_check_branch
      %54 = sbr.rel (0) target = $region29
    $region28: #{tpu_custom_call.1} parent=1 // pred_region
      %55 = dma.done [#allocation7], 2048
    $region29: #{tpu_custom_call.1} parent=1 // pred_fallthru
      _
    %v56 = vld [vmem:[#allocation3] sm:$0xff]
    %v57 = vld [vmem:[#allocation6] sm:$0xff]
    %v58 = vlaneseq
    %v59 = vshrl.u32 %v58, 7
    %v60 = vadd.s32 %v59, 8
    %v61 = vadd.s32 %v59, 16
    %v62 = vadd.s32 %v59, 24
    %v63 = vadd.s32 %v59, 32
    %v64 = vadd.s32 %v59, 40
    %v65 = vadd.s32 %v59, 48
    %v66 = vadd.s32 %v59, 56
    %v67 = vadd.s32 %v59, 64
    %v68 = vadd.s32 %v59, 72
    %v69 = vadd.s32 %v59, 80
    %v70 = vadd.s32 %v59, 88
    %v71 = vadd.s32 %v59, 96
    %v72 = vadd.s32 %v59, 104
    %v73 = vadd.s32 %v59, 112
    %v74 = vadd.s32 %v59, 120
    %v75 = vadd.s32 %v59, 128
    %v76 = vadd.s32 %v59, 136
    %v77 = vadd.s32 %v59, 144
    %v78 = vadd.s32 %v59, 152
    %v79 = vadd.s32 %v59, 160
    %v80 = vadd.s32 %v59, 168
    %v81 = vadd.s32 %v59, 176
    %v82 = vadd.s32 %v59, 184
    %v83 = vadd.s32 %v59, 192
    %v84 = vadd.s32 %v59, 200
    %v85 = vadd.s32 %v59, 208
    %v86 = vadd.s32 %v59, 216
    %v87 = vadd.s32 %v59, 224
    %v88 = vadd.s32 %v59, 232
    %v89 = vadd.s32 %v59, 240
    %v90 = vadd.s32 %v59, 248
    %v91 = vlaneseq
    %v92 = vshrl.u32 %v91, 7
    %v93 = vsub.s32 0, %v92
    %v94 = vrot.slane %v56, %v93
    %v95 = vlaneseq
    %v96 = vshrl.u32 %v95, 7
    %v97 = vsub.s32 1, %v96
    %v98 = vrot.slane %v56, %v97
    %v99 = vlaneseq
    %v100 = vshrl.u32 %v99, 7
    %v101 = vsub.s32 2, %v100
    %v102 = vrot.slane %v56, %v101
    %v103 = vlaneseq
    %v104 = vshrl.u32 %v103, 7
    %v105 = vsub.s32 3, %v104
    %v106 = vrot.slane %v56, %v105
    %v107 = vlaneseq
    %v108 = vshrl.u32 %v107, 7
    %v109 = vsub.s32 4, %v108
    %v110 = vrot.slane %v56, %v109
    %v111 = vlaneseq
    %v112 = vshrl.u32 %v111, 7
    %v113 = vsub.s32 5, %v112
    %v114 = vrot.slane %v56, %v113
    %v115 = vlaneseq
    %v116 = vshrl.u32 %v115, 7
    %v117 = vsub.s32 6, %v116
    %v118 = vrot.slane %v56, %v117
    %v119 = vlaneseq
    %v120 = vshrl.u32 %v119, 7
    %v121 = vsub.s32 7, %v120
    %v122 = vrot.slane %v56, %v121
    %vm123 = vcmp.eq.s32.totalorder %v59, %v94
    %vm124 = vcmp.eq.s32.totalorder %v59, %v98
    %vm125 = vcmp.eq.s32.totalorder %v59, %v102
    %vm126 = vcmp.eq.s32.totalorder %v59, %v106
    %vm127 = vcmp.eq.s32.totalorder %v59, %v110
    %vm128 = vcmp.eq.s32.totalorder %v59, %v114
    %vm129 = vcmp.eq.s32.totalorder %v59, %v118
    %vm130 = vcmp.eq.s32.totalorder %v59, %v122
    %vm131 = vcmp.eq.s32.totalorder %v60, %v94
    %vm132 = vcmp.eq.s32.totalorder %v60, %v98
    %vm133 = vcmp.eq.s32.totalorder %v60, %v102
    %vm134 = vcmp.eq.s32.totalorder %v60, %v106
    %vm135 = vcmp.eq.s32.totalorder %v60, %v110
    %vm136 = vcmp.eq.s32.totalorder %v60, %v114
    %vm137 = vcmp.eq.s32.totalorder %v60, %v118
    %vm138 = vcmp.eq.s32.totalorder %v60, %v122
    %vm139 = vcmp.eq.s32.totalorder %v61, %v94
    %vm140 = vcmp.eq.s32.totalorder %v61, %v98
    %vm141 = vcmp.eq.s32.totalorder %v61, %v102
    %vm142 = vcmp.eq.s32.totalorder %v61, %v106
    %vm143 = vcmp.eq.s32.totalorder %v61, %v110
    %vm144 = vcmp.eq.s32.totalorder %v61, %v114
    %vm145 = vcmp.eq.s32.totalorder %v61, %v118
    %vm146 = vcmp.eq.s32.totalorder %v61, %v122
    %vm147 = vcmp.eq.s32.totalorder %v62, %v94
    %vm148 = vcmp.eq.s32.totalorder %v62, %v98
    %vm149 = vcmp.eq.s32.totalorder %v62, %v102
    %vm150 = vcmp.eq.s32.totalorder %v62, %v106
    %vm151 = vcmp.eq.s32.totalorder %v62, %v110
    %vm152 = vcmp.eq.s32.totalorder %v62, %v114
    %vm153 = vcmp.eq.s32.totalorder %v62, %v118
    %vm154 = vcmp.eq.s32.totalorder %v62, %v122
    %vm155 = vcmp.eq.s32.totalorder %v63, %v94
    %vm156 = vcmp.eq.s32.totalorder %v63, %v98
    %vm157 = vcmp.eq.s32.totalorder %v63, %v102
    %vm158 = vcmp.eq.s32.totalorder %v63, %v106
    %vm159 = vcmp.eq.s32.totalorder %v63, %v110
    %vm160 = vcmp.eq.s32.totalorder %v63, %v114
    %vm161 = vcmp.eq.s32.totalorder %v63, %v118
    %vm162 = vcmp.eq.s32.totalorder %v63, %v122
    %vm163 = vcmp.eq.s32.totalorder %v64, %v94
    %vm164 = vcmp.eq.s32.totalorder %v64, %v98
    %vm165 = vcmp.eq.s32.totalorder %v64, %v102
    %vm166 = vcmp.eq.s32.totalorder %v64, %v106
    %vm167 = vcmp.eq.s32.totalorder %v64, %v110
    %vm168 = vcmp.eq.s32.totalorder %v64, %v114
    %vm169 = vcmp.eq.s32.totalorder %v64, %v118
    %vm170 = vcmp.eq.s32.totalorder %v64, %v122
    %vm171 = vcmp.eq.s32.totalorder %v65, %v94
    %vm172 = vcmp.eq.s32.totalorder %v65, %v98
    %vm173 = vcmp.eq.s32.totalorder %v65, %v102
    %vm174 = vcmp.eq.s32.totalorder %v65, %v106
    %vm175 = vcmp.eq.s32.totalorder %v65, %v110
    %vm176 = vcmp.eq.s32.totalorder %v65, %v114
    %vm177 = vcmp.eq.s32.totalorder %v65, %v118
    %vm178 = vcmp.eq.s32.totalorder %v65, %v122
    %vm179 = vcmp.eq.s32.totalorder %v66, %v94
    %vm180 = vcmp.eq.s32.totalorder %v66, %v98
    %vm181 = vcmp.eq.s32.totalorder %v66, %v102
    %vm182 = vcmp.eq.s32.totalorder %v66, %v106
    %vm183 = vcmp.eq.s32.totalorder %v66, %v110
    %vm184 = vcmp.eq.s32.totalorder %v66, %v114
    %vm185 = vcmp.eq.s32.totalorder %v66, %v118
    %vm186 = vcmp.eq.s32.totalorder %v66, %v122
    %vm187 = vcmp.eq.s32.totalorder %v67, %v94
    %vm188 = vcmp.eq.s32.totalorder %v67, %v98
    %vm189 = vcmp.eq.s32.totalorder %v67, %v102
    %vm190 = vcmp.eq.s32.totalorder %v67, %v106
    %vm191 = vcmp.eq.s32.totalorder %v67, %v110
    %vm192 = vcmp.eq.s32.totalorder %v67, %v114
    %vm193 = vcmp.eq.s32.totalorder %v67, %v118
    %vm194 = vcmp.eq.s32.totalorder %v67, %v122
    %vm195 = vcmp.eq.s32.totalorder %v68, %v94
    %vm196 = vcmp.eq.s32.totalorder %v68, %v98
    %vm197 = vcmp.eq.s32.totalorder %v68, %v102
    %vm198 = vcmp.eq.s32.totalorder %v68, %v106
    %vm199 = vcmp.eq.s32.totalorder %v68, %v110
    %vm200 = vcmp.eq.s32.totalorder %v68, %v114
    %vm201 = vcmp.eq.s32.totalorder %v68, %v118
    %vm202 = vcmp.eq.s32.totalorder %v68, %v122
    %vm203 = vcmp.eq.s32.totalorder %v69, %v94
    %vm204 = vcmp.eq.s32.totalorder %v69, %v98
    %vm205 = vcmp.eq.s32.totalorder %v69, %v102
    %vm206 = vcmp.eq.s32.totalorder %v69, %v106
    %vm207 = vcmp.eq.s32.totalorder %v69, %v110
    %vm208 = vcmp.eq.s32.totalorder %v69, %v114
    %vm209 = vcmp.eq.s32.totalorder %v69, %v118
    %vm210 = vcmp.eq.s32.totalorder %v69, %v122
    %vm211 = vcmp.eq.s32.totalorder %v70, %v94
    %vm212 = vcmp.eq.s32.totalorder %v70, %v98
    %vm213 = vcmp.eq.s32.totalorder %v70, %v102
    %vm214 = vcmp.eq.s32.totalorder %v70, %v106
    %vm215 = vcmp.eq.s32.totalorder %v70, %v110
    %vm216 = vcmp.eq.s32.totalorder %v70, %v114
    %vm217 = vcmp.eq.s32.totalorder %v70, %v118
    %vm218 = vcmp.eq.s32.totalorder %v70, %v122
    %vm219 = vcmp.eq.s32.totalorder %v71, %v94
    %vm220 = vcmp.eq.s32.totalorder %v71, %v98
    %vm221 = vcmp.eq.s32.totalorder %v71, %v102
    %vm222 = vcmp.eq.s32.totalorder %v71, %v106
    %vm223 = vcmp.eq.s32.totalorder %v71, %v110
    %vm224 = vcmp.eq.s32.totalorder %v71, %v114
    %vm225 = vcmp.eq.s32.totalorder %v71, %v118
    %vm226 = vcmp.eq.s32.totalorder %v71, %v122
    %vm227 = vcmp.eq.s32.totalorder %v72, %v94
    %vm228 = vcmp.eq.s32.totalorder %v72, %v98
    %vm229 = vcmp.eq.s32.totalorder %v72, %v102
    %vm230 = vcmp.eq.s32.totalorder %v72, %v106
    %vm231 = vcmp.eq.s32.totalorder %v72, %v110
    %vm232 = vcmp.eq.s32.totalorder %v72, %v114
    %vm233 = vcmp.eq.s32.totalorder %v72, %v118
    %vm234 = vcmp.eq.s32.totalorder %v72, %v122
    %vm235 = vcmp.eq.s32.totalorder %v73, %v94
    %vm236 = vcmp.eq.s32.totalorder %v73, %v98
    %vm237 = vcmp.eq.s32.totalorder %v73, %v102
    %vm238 = vcmp.eq.s32.totalorder %v73, %v106
    %vm239 = vcmp.eq.s32.totalorder %v73, %v110
    %vm240 = vcmp.eq.s32.totalorder %v73, %v114
    %vm241 = vcmp.eq.s32.totalorder %v73, %v118
    %vm242 = vcmp.eq.s32.totalorder %v73, %v122
    %vm243 = vcmp.eq.s32.totalorder %v74, %v94
    %vm244 = vcmp.eq.s32.totalorder %v74, %v98
    %vm245 = vcmp.eq.s32.totalorder %v74, %v102
    %vm246 = vcmp.eq.s32.totalorder %v74, %v106
    %vm247 = vcmp.eq.s32.totalorder %v74, %v110
    %vm248 = vcmp.eq.s32.totalorder %v74, %v114
    %vm249 = vcmp.eq.s32.totalorder %v74, %v118
    %vm250 = vcmp.eq.s32.totalorder %v74, %v122
    %vm251 = vcmp.eq.s32.totalorder %v75, %v94
    %vm252 = vcmp.eq.s32.totalorder %v75, %v98
    %vm253 = vcmp.eq.s32.totalorder %v75, %v102
    %vm254 = vcmp.eq.s32.totalorder %v75, %v106
    %vm255 = vcmp.eq.s32.totalorder %v75, %v110
    %vm256 = vcmp.eq.s32.totalorder %v75, %v114
    %vm257 = vcmp.eq.s32.totalorder %v75, %v118
    %vm258 = vcmp.eq.s32.totalorder %v75, %v122
    %vm259 = vcmp.eq.s32.totalorder %v76, %v94
    %vm260 = vcmp.eq.s32.totalorder %v76, %v98
    %vm261 = vcmp.eq.s32.totalorder %v76, %v102
    %vm262 = vcmp.eq.s32.totalorder %v76, %v106
    %vm263 = vcmp.eq.s32.totalorder %v76, %v110
    %vm264 = vcmp.eq.s32.totalorder %v76, %v114
    %vm265 = vcmp.eq.s32.totalorder %v76, %v118
    %vm266 = vcmp.eq.s32.totalorder %v76, %v122
    %vm267 = vcmp.eq.s32.totalorder %v77, %v94
    %vm268 = vcmp.eq.s32.totalorder %v77, %v98
    %vm269 = vcmp.eq.s32.totalorder %v77, %v102
    %vm270 = vcmp.eq.s32.totalorder %v77, %v106
    %vm271 = vcmp.eq.s32.totalorder %v77, %v110
    %vm272 = vcmp.eq.s32.totalorder %v77, %v114
    %vm273 = vcmp.eq.s32.totalorder %v77, %v118
    %vm274 = vcmp.eq.s32.totalorder %v77, %v122
    %vm275 = vcmp.eq.s32.totalorder %v78, %v94
    %vm276 = vcmp.eq.s32.totalorder %v78, %v98
    %vm277 = vcmp.eq.s32.totalorder %v78, %v102
    %vm278 = vcmp.eq.s32.totalorder %v78, %v106
    %vm279 = vcmp.eq.s32.totalorder %v78, %v110
    %vm280 = vcmp.eq.s32.totalorder %v78, %v114
    %vm281 = vcmp.eq.s32.totalorder %v78, %v118
    %vm282 = vcmp.eq.s32.totalorder %v78, %v122
    %vm283 = vcmp.eq.s32.totalorder %v79, %v94
    %vm284 = vcmp.eq.s32.totalorder %v79, %v98
    %vm285 = vcmp.eq.s32.totalorder %v79, %v102
    %vm286 = vcmp.eq.s32.totalorder %v79, %v106
    %vm287 = vcmp.eq.s32.totalorder %v79, %v110
    %vm288 = vcmp.eq.s32.totalorder %v79, %v114
    %vm289 = vcmp.eq.s32.totalorder %v79, %v118
    %vm290 = vcmp.eq.s32.totalorder %v79, %v122
    %vm291 = vcmp.eq.s32.totalorder %v80, %v94
    %vm292 = vcmp.eq.s32.totalorder %v80, %v98
    %vm293 = vcmp.eq.s32.totalorder %v80, %v102
    %vm294 = vcmp.eq.s32.totalorder %v80, %v106
    %vm295 = vcmp.eq.s32.totalorder %v80, %v110
    %vm296 = vcmp.eq.s32.totalorder %v80, %v114
    %vm297 = vcmp.eq.s32.totalorder %v80, %v118
    %vm298 = vcmp.eq.s32.totalorder %v80, %v122
    %vm299 = vcmp.eq.s32.totalorder %v81, %v94
    %vm300 = vcmp.eq.s32.totalorder %v81, %v98
    %vm301 = vcmp.eq.s32.totalorder %v81, %v102
    %vm302 = vcmp.eq.s32.totalorder %v81, %v106
    %vm303 = vcmp.eq.s32.totalorder %v81, %v110
    %vm304 = vcmp.eq.s32.totalorder %v81, %v114
    %vm305 = vcmp.eq.s32.totalorder %v81, %v118
    %vm306 = vcmp.eq.s32.totalorder %v81, %v122
    %vm307 = vcmp.eq.s32.totalorder %v82, %v94
    %vm308 = vcmp.eq.s32.totalorder %v82, %v98
    %vm309 = vcmp.eq.s32.totalorder %v82, %v102
    %vm310 = vcmp.eq.s32.totalorder %v82, %v106
    %vm311 = vcmp.eq.s32.totalorder %v82, %v110
    %vm312 = vcmp.eq.s32.totalorder %v82, %v114
    %vm313 = vcmp.eq.s32.totalorder %v82, %v118
    %vm314 = vcmp.eq.s32.totalorder %v82, %v122
    %vm315 = vcmp.eq.s32.totalorder %v83, %v94
    %vm316 = vcmp.eq.s32.totalorder %v83, %v98
    %vm317 = vcmp.eq.s32.totalorder %v83, %v102
    %vm318 = vcmp.eq.s32.totalorder %v83, %v106
    %vm319 = vcmp.eq.s32.totalorder %v83, %v110
    %vm320 = vcmp.eq.s32.totalorder %v83, %v114
    %vm321 = vcmp.eq.s32.totalorder %v83, %v118
    %vm322 = vcmp.eq.s32.totalorder %v83, %v122
    %vm323 = vcmp.eq.s32.totalorder %v84, %v94
    %vm324 = vcmp.eq.s32.totalorder %v84, %v98
    %vm325 = vcmp.eq.s32.totalorder %v84, %v102
    %vm326 = vcmp.eq.s32.totalorder %v84, %v106
    %vm327 = vcmp.eq.s32.totalorder %v84, %v110
    %vm328 = vcmp.eq.s32.totalorder %v84, %v114
    %vm329 = vcmp.eq.s32.totalorder %v84, %v118
    %vm330 = vcmp.eq.s32.totalorder %v84, %v122
    %vm331 = vcmp.eq.s32.totalorder %v85, %v94
    %vm332 = vcmp.eq.s32.totalorder %v85, %v98
    %vm333 = vcmp.eq.s32.totalorder %v85, %v102
    %vm334 = vcmp.eq.s32.totalorder %v85, %v106
    %vm335 = vcmp.eq.s32.totalorder %v85, %v110
    %vm336 = vcmp.eq.s32.totalorder %v85, %v114
    %vm337 = vcmp.eq.s32.totalorder %v85, %v118
    %vm338 = vcmp.eq.s32.totalorder %v85, %v122
    %vm339 = vcmp.eq.s32.totalorder %v86, %v94
    %vm340 = vcmp.eq.s32.totalorder %v86, %v98
    %vm341 = vcmp.eq.s32.totalorder %v86, %v102
    %vm342 = vcmp.eq.s32.totalorder %v86, %v106
    %vm343 = vcmp.eq.s32.totalorder %v86, %v110
    %vm344 = vcmp.eq.s32.totalorder %v86, %v114
    %vm345 = vcmp.eq.s32.totalorder %v86, %v118
    %vm346 = vcmp.eq.s32.totalorder %v86, %v122
    %vm347 = vcmp.eq.s32.totalorder %v87, %v94
    %vm348 = vcmp.eq.s32.totalorder %v87, %v98
    %vm349 = vcmp.eq.s32.totalorder %v87, %v102
    %vm350 = vcmp.eq.s32.totalorder %v87, %v106
    %vm351 = vcmp.eq.s32.totalorder %v87, %v110
    %vm352 = vcmp.eq.s32.totalorder %v87, %v114
    %vm353 = vcmp.eq.s32.totalorder %v87, %v118
    %vm354 = vcmp.eq.s32.totalorder %v87, %v122
    %vm355 = vcmp.eq.s32.totalorder %v88, %v94
    %vm356 = vcmp.eq.s32.totalorder %v88, %v98
    %vm357 = vcmp.eq.s32.totalorder %v88, %v102
    %vm358 = vcmp.eq.s32.totalorder %v88, %v106
    %vm359 = vcmp.eq.s32.totalorder %v88, %v110
    %vm360 = vcmp.eq.s32.totalorder %v88, %v114
    %vm361 = vcmp.eq.s32.totalorder %v88, %v118
    %vm362 = vcmp.eq.s32.totalorder %v88, %v122
    %vm363 = vcmp.eq.s32.totalorder %v89, %v94
    %vm364 = vcmp.eq.s32.totalorder %v89, %v98
    %vm365 = vcmp.eq.s32.totalorder %v89, %v102
    %vm366 = vcmp.eq.s32.totalorder %v89, %v106
    %vm367 = vcmp.eq.s32.totalorder %v89, %v110
    %vm368 = vcmp.eq.s32.totalorder %v89, %v114
    %vm369 = vcmp.eq.s32.totalorder %v89, %v118
    %vm370 = vcmp.eq.s32.totalorder %v89, %v122
    %vm371 = vcmp.eq.s32.totalorder %v90, %v94
    %vm372 = vcmp.eq.s32.totalorder %v90, %v98
    %vm373 = vcmp.eq.s32.totalorder %v90, %v102
    %vm374 = vcmp.eq.s32.totalorder %v90, %v106
    %vm375 = vcmp.eq.s32.totalorder %v90, %v110
    %vm376 = vcmp.eq.s32.totalorder %v90, %v114
    %vm377 = vcmp.eq.s32.totalorder %v90, %v118
    %vm378 = vcmp.eq.s32.totalorder %v90, %v122
    %v379 = vadd.s32 %v57, 128
    %v380 = vlaneseq
    %v381 = vshrl.u32 %v380, 7
    %v382 = vsub.s32 0, %v381
    %v383 = vrot.slane %v379, %v382
    %v384 = vlaneseq
    %v385 = vshrl.u32 %v384, 7
    %v386 = vsub.s32 1, %v385
    %v387 = vrot.slane %v379, %v386
    %v388 = vlaneseq
    %v389 = vshrl.u32 %v388, 7
    %v390 = vsub.s32 2, %v389
    %v391 = vrot.slane %v379, %v390
    %v392 = vlaneseq
    %v393 = vshrl.u32 %v392, 7
    %v394 = vsub.s32 3, %v393
    %v395 = vrot.slane %v379, %v394
    %v396 = vlaneseq
    %v397 = vshrl.u32 %v396, 7
    %v398 = vsub.s32 4, %v397
    %v399 = vrot.slane %v379, %v398
    %v400 = vlaneseq
    %v401 = vshrl.u32 %v400, 7
    %v402 = vsub.s32 5, %v401
    %v403 = vrot.slane %v379, %v402
    %v404 = vlaneseq
    %v405 = vshrl.u32 %v404, 7
    %v406 = vsub.s32 6, %v405
    %v407 = vrot.slane %v379, %v406
    %v408 = vlaneseq
    %v409 = vshrl.u32 %v408, 7
    %v410 = vsub.s32 7, %v409
    %v411 = vrot.slane %v379, %v410
    %vm412 = vcmp.eq.s32.totalorder %v59, %v383
    %vm413 = vcmp.eq.s32.totalorder %v59, %v387
    %vm414 = vcmp.eq.s32.totalorder %v59, %v391
    %vm415 = vcmp.eq.s32.totalorder %v59, %v395
    %vm416 = vcmp.eq.s32.totalorder %v59, %v399
    %vm417 = vcmp.eq.s32.totalorder %v59, %v403
    %vm418 = vcmp.eq.s32.totalorder %v59, %v407
    %vm419 = vcmp.eq.s32.totalorder %v59, %v411
    %vm420 = vcmp.eq.s32.totalorder %v60, %v383
    %vm421 = vcmp.eq.s32.totalorder %v60, %v387
    %vm422 = vcmp.eq.s32.totalorder %v60, %v391
    %vm423 = vcmp.eq.s32.totalorder %v60, %v395
    %vm424 = vcmp.eq.s32.totalorder %v60, %v399
    %vm425 = vcmp.eq.s32.totalorder %v60, %v403
    %vm426 = vcmp.eq.s32.totalorder %v60, %v407
    %vm427 = vcmp.eq.s32.totalorder %v60, %v411
    %vm428 = vcmp.eq.s32.totalorder %v61, %v383
    %vm429 = vcmp.eq.s32.totalorder %v61, %v387
    %vm430 = vcmp.eq.s32.totalorder %v61, %v391
    %vm431 = vcmp.eq.s32.totalorder %v61, %v395
    %vm432 = vcmp.eq.s32.totalorder %v61, %v399
    %vm433 = vcmp.eq.s32.totalorder %v61, %v403
    %vm434 = vcmp.eq.s32.totalorder %v61, %v407
    %vm435 = vcmp.eq.s32.totalorder %v61, %v411
    %vm436 = vcmp.eq.s32.totalorder %v62, %v383
    %vm437 = vcmp.eq.s32.totalorder %v62, %v387
    %vm438 = vcmp.eq.s32.totalorder %v62, %v391
    %vm439 = vcmp.eq.s32.totalorder %v62, %v395
    %vm440 = vcmp.eq.s32.totalorder %v62, %v399
    %vm441 = vcmp.eq.s32.totalorder %v62, %v403
    %vm442 = vcmp.eq.s32.totalorder %v62, %v407
    %vm443 = vcmp.eq.s32.totalorder %v62, %v411
    %vm444 = vcmp.eq.s32.totalorder %v63, %v383
    %vm445 = vcmp.eq.s32.totalorder %v63, %v387
    %vm446 = vcmp.eq.s32.totalorder %v63, %v391
    %vm447 = vcmp.eq.s32.totalorder %v63, %v395
    %vm448 = vcmp.eq.s32.totalorder %v63, %v399
    %vm449 = vcmp.eq.s32.totalorder %v63, %v403
    %vm450 = vcmp.eq.s32.totalorder %v63, %v407
    %vm451 = vcmp.eq.s32.totalorder %v63, %v411
    %vm452 = vcmp.eq.s32.totalorder %v64, %v383
    %vm453 = vcmp.eq.s32.totalorder %v64, %v387
    %vm454 = vcmp.eq.s32.totalorder %v64, %v391
    %vm455 = vcmp.eq.s32.totalorder %v64, %v395
    %vm456 = vcmp.eq.s32.totalorder %v64, %v399
    %vm457 = vcmp.eq.s32.totalorder %v64, %v403
    %vm458 = vcmp.eq.s32.totalorder %v64, %v407
    %vm459 = vcmp.eq.s32.totalorder %v64, %v411
    %vm460 = vcmp.eq.s32.totalorder %v65, %v383
    %vm461 = vcmp.eq.s32.totalorder %v65, %v387
    %vm462 = vcmp.eq.s32.totalorder %v65, %v391
    %vm463 = vcmp.eq.s32.totalorder %v65, %v395
    %vm464 = vcmp.eq.s32.totalorder %v65, %v399
    %vm465 = vcmp.eq.s32.totalorder %v65, %v403
    %vm466 = vcmp.eq.s32.totalorder %v65, %v407
    %vm467 = vcmp.eq.s32.totalorder %v65, %v411
    %vm468 = vcmp.eq.s32.totalorder %v66, %v383
    %vm469 = vcmp.eq.s32.totalorder %v66, %v387
    %vm470 = vcmp.eq.s32.totalorder %v66, %v391
    %vm471 = vcmp.eq.s32.totalorder %v66, %v395
    %vm472 = vcmp.eq.s32.totalorder %v66, %v399
    %vm473 = vcmp.eq.s32.totalorder %v66, %v403
    %vm474 = vcmp.eq.s32.totalorder %v66, %v407
    %vm475 = vcmp.eq.s32.totalorder %v66, %v411
    %vm476 = vcmp.eq.s32.totalorder %v67, %v383
    %vm477 = vcmp.eq.s32.totalorder %v67, %v387
    %vm478 = vcmp.eq.s32.totalorder %v67, %v391
    %vm479 = vcmp.eq.s32.totalorder %v67, %v395
    %vm480 = vcmp.eq.s32.totalorder %v67, %v399
    %vm481 = vcmp.eq.s32.totalorder %v67, %v403
    %vm482 = vcmp.eq.s32.totalorder %v67, %v407
    %vm483 = vcmp.eq.s32.totalorder %v67, %v411
    %vm484 = vcmp.eq.s32.totalorder %v68, %v383
    %vm485 = vcmp.eq.s32.totalorder %v68, %v387
    %vm486 = vcmp.eq.s32.totalorder %v68, %v391
    %vm487 = vcmp.eq.s32.totalorder %v68, %v395
    %vm488 = vcmp.eq.s32.totalorder %v68, %v399
    %vm489 = vcmp.eq.s32.totalorder %v68, %v403
    %vm490 = vcmp.eq.s32.totalorder %v68, %v407
    %vm491 = vcmp.eq.s32.totalorder %v68, %v411
    %vm492 = vcmp.eq.s32.totalorder %v69, %v383
    %vm493 = vcmp.eq.s32.totalorder %v69, %v387
    %vm494 = vcmp.eq.s32.totalorder %v69, %v391
    %vm495 = vcmp.eq.s32.totalorder %v69, %v395
    %vm496 = vcmp.eq.s32.totalorder %v69, %v399
    %vm497 = vcmp.eq.s32.totalorder %v69, %v403
    %vm498 = vcmp.eq.s32.totalorder %v69, %v407
    %vm499 = vcmp.eq.s32.totalorder %v69, %v411
    %vm500 = vcmp.eq.s32.totalorder %v70, %v383
    %vm501 = vcmp.eq.s32.totalorder %v70, %v387
    %vm502 = vcmp.eq.s32.totalorder %v70, %v391
    %vm503 = vcmp.eq.s32.totalorder %v70, %v395
    %vm504 = vcmp.eq.s32.totalorder %v70, %v399
    %vm505 = vcmp.eq.s32.totalorder %v70, %v403
    %vm506 = vcmp.eq.s32.totalorder %v70, %v407
    %vm507 = vcmp.eq.s32.totalorder %v70, %v411
    %vm508 = vcmp.eq.s32.totalorder %v71, %v383
    %vm509 = vcmp.eq.s32.totalorder %v71, %v387
    %vm510 = vcmp.eq.s32.totalorder %v71, %v391
    %vm511 = vcmp.eq.s32.totalorder %v71, %v395
    %vm512 = vcmp.eq.s32.totalorder %v71, %v399
    %vm513 = vcmp.eq.s32.totalorder %v71, %v403
    %vm514 = vcmp.eq.s32.totalorder %v71, %v407
    %vm515 = vcmp.eq.s32.totalorder %v71, %v411
    %vm516 = vcmp.eq.s32.totalorder %v72, %v383
    %vm517 = vcmp.eq.s32.totalorder %v72, %v387
    %vm518 = vcmp.eq.s32.totalorder %v72, %v391
    %vm519 = vcmp.eq.s32.totalorder %v72, %v395
    %vm520 = vcmp.eq.s32.totalorder %v72, %v399
    %vm521 = vcmp.eq.s32.totalorder %v72, %v403
    %vm522 = vcmp.eq.s32.totalorder %v72, %v407
    %vm523 = vcmp.eq.s32.totalorder %v72, %v411
    %vm524 = vcmp.eq.s32.totalorder %v73, %v383
    %vm525 = vcmp.eq.s32.totalorder %v73, %v387
    %vm526 = vcmp.eq.s32.totalorder %v73, %v391
    %vm527 = vcmp.eq.s32.totalorder %v73, %v395
    %vm528 = vcmp.eq.s32.totalorder %v73, %v399
    %vm529 = vcmp.eq.s32.totalorder %v73, %v403
    %vm530 = vcmp.eq.s32.totalorder %v73, %v407
    %vm531 = vcmp.eq.s32.totalorder %v73, %v411
    %vm532 = vcmp.eq.s32.totalorder %v74, %v383
    %vm533 = vcmp.eq.s32.totalorder %v74, %v387
    %vm534 = vcmp.eq.s32.totalorder %v74, %v391
    %vm535 = vcmp.eq.s32.totalorder %v74, %v395
    %vm536 = vcmp.eq.s32.totalorder %v74, %v399
    %vm537 = vcmp.eq.s32.totalorder %v74, %v403
    %vm538 = vcmp.eq.s32.totalorder %v74, %v407
    %vm539 = vcmp.eq.s32.totalorder %v74, %v411
    %vm540 = vcmp.eq.s32.totalorder %v75, %v383
    %vm541 = vcmp.eq.s32.totalorder %v75, %v387
    %vm542 = vcmp.eq.s32.totalorder %v75, %v391
    %vm543 = vcmp.eq.s32.totalorder %v75, %v395
    %vm544 = vcmp.eq.s32.totalorder %v75, %v399
    %vm545 = vcmp.eq.s32.totalorder %v75, %v403
    %vm546 = vcmp.eq.s32.totalorder %v75, %v407
    %vm547 = vcmp.eq.s32.totalorder %v75, %v411
    %vm548 = vcmp.eq.s32.totalorder %v76, %v383
    %vm549 = vcmp.eq.s32.totalorder %v76, %v387
    %vm550 = vcmp.eq.s32.totalorder %v76, %v391
    %vm551 = vcmp.eq.s32.totalorder %v76, %v395
    %vm552 = vcmp.eq.s32.totalorder %v76, %v399
    %vm553 = vcmp.eq.s32.totalorder %v76, %v403
    %vm554 = vcmp.eq.s32.totalorder %v76, %v407
    %vm555 = vcmp.eq.s32.totalorder %v76, %v411
    %vm556 = vcmp.eq.s32.totalorder %v77, %v383
    %vm557 = vcmp.eq.s32.totalorder %v77, %v387
    %vm558 = vcmp.eq.s32.totalorder %v77, %v391
    %vm559 = vcmp.eq.s32.totalorder %v77, %v395
    %vm560 = vcmp.eq.s32.totalorder %v77, %v399
    %vm561 = vcmp.eq.s32.totalorder %v77, %v403
    %vm562 = vcmp.eq.s32.totalorder %v77, %v407
    %vm563 = vcmp.eq.s32.totalorder %v77, %v411
    %vm564 = vcmp.eq.s32.totalorder %v78, %v383
    %vm565 = vcmp.eq.s32.totalorder %v78, %v387
    %vm566 = vcmp.eq.s32.totalorder %v78, %v391
    %vm567 = vcmp.eq.s32.totalorder %v78, %v395
    %vm568 = vcmp.eq.s32.totalorder %v78, %v399
    %vm569 = vcmp.eq.s32.totalorder %v78, %v403
    %vm570 = vcmp.eq.s32.totalorder %v78, %v407
    %vm571 = vcmp.eq.s32.totalorder %v78, %v411
    %vm572 = vcmp.eq.s32.totalorder %v79, %v383
    %vm573 = vcmp.eq.s32.totalorder %v79, %v387
    %vm574 = vcmp.eq.s32.totalorder %v79, %v391
    %vm575 = vcmp.eq.s32.totalorder %v79, %v395
    %vm576 = vcmp.eq.s32.totalorder %v79, %v399
    %vm577 = vcmp.eq.s32.totalorder %v79, %v403
    %vm578 = vcmp.eq.s32.totalorder %v79, %v407
    %vm579 = vcmp.eq.s32.totalorder %v79, %v411
    %vm580 = vcmp.eq.s32.totalorder %v80, %v383
    %vm581 = vcmp.eq.s32.totalorder %v80, %v387
    %vm582 = vcmp.eq.s32.totalorder %v80, %v391
    %vm583 = vcmp.eq.s32.totalorder %v80, %v395
    %vm584 = vcmp.eq.s32.totalorder %v80, %v399
    %vm585 = vcmp.eq.s32.totalorder %v80, %v403
    %vm586 = vcmp.eq.s32.totalorder %v80, %v407
    %vm587 = vcmp.eq.s32.totalorder %v80, %v411
    %vm588 = vcmp.eq.s32.totalorder %v81, %v383
    %vm589 = vcmp.eq.s32.totalorder %v81, %v387
    %vm590 = vcmp.eq.s32.totalorder %v81, %v391
    %vm591 = vcmp.eq.s32.totalorder %v81, %v395
    %vm592 = vcmp.eq.s32.totalorder %v81, %v399
    %vm593 = vcmp.eq.s32.totalorder %v81, %v403
    %vm594 = vcmp.eq.s32.totalorder %v81, %v407
    %vm595 = vcmp.eq.s32.totalorder %v81, %v411
    %vm596 = vcmp.eq.s32.totalorder %v82, %v383
    %vm597 = vcmp.eq.s32.totalorder %v82, %v387
    %vm598 = vcmp.eq.s32.totalorder %v82, %v391
    %vm599 = vcmp.eq.s32.totalorder %v82, %v395
    %vm600 = vcmp.eq.s32.totalorder %v82, %v399
    %vm601 = vcmp.eq.s32.totalorder %v82, %v403
    %vm602 = vcmp.eq.s32.totalorder %v82, %v407
    %vm603 = vcmp.eq.s32.totalorder %v82, %v411
    %vm604 = vcmp.eq.s32.totalorder %v83, %v383
    %vm605 = vcmp.eq.s32.totalorder %v83, %v387
    %vm606 = vcmp.eq.s32.totalorder %v83, %v391
    %vm607 = vcmp.eq.s32.totalorder %v83, %v395
    %vm608 = vcmp.eq.s32.totalorder %v83, %v399
    %vm609 = vcmp.eq.s32.totalorder %v83, %v403
    %vm610 = vcmp.eq.s32.totalorder %v83, %v407
    %vm611 = vcmp.eq.s32.totalorder %v83, %v411
    %vm612 = vcmp.eq.s32.totalorder %v84, %v383
    %vm613 = vcmp.eq.s32.totalorder %v84, %v387
    %vm614 = vcmp.eq.s32.totalorder %v84, %v391
    %vm615 = vcmp.eq.s32.totalorder %v84, %v395
    %vm616 = vcmp.eq.s32.totalorder %v84, %v399
    %vm617 = vcmp.eq.s32.totalorder %v84, %v403
    %vm618 = vcmp.eq.s32.totalorder %v84, %v407
    %vm619 = vcmp.eq.s32.totalorder %v84, %v411
    %vm620 = vcmp.eq.s32.totalorder %v85, %v383
    %vm621 = vcmp.eq.s32.totalorder %v85, %v387
    %vm622 = vcmp.eq.s32.totalorder %v85, %v391
    %vm623 = vcmp.eq.s32.totalorder %v85, %v395
    %vm624 = vcmp.eq.s32.totalorder %v85, %v399
    %vm625 = vcmp.eq.s32.totalorder %v85, %v403
    %vm626 = vcmp.eq.s32.totalorder %v85, %v407
    %vm627 = vcmp.eq.s32.totalorder %v85, %v411
    %vm628 = vcmp.eq.s32.totalorder %v86, %v383
    %vm629 = vcmp.eq.s32.totalorder %v86, %v387
    %vm630 = vcmp.eq.s32.totalorder %v86, %v391
    %vm631 = vcmp.eq.s32.totalorder %v86, %v395
    %vm632 = vcmp.eq.s32.totalorder %v86, %v399
    %vm633 = vcmp.eq.s32.totalorder %v86, %v403
    %vm634 = vcmp.eq.s32.totalorder %v86, %v407
    %vm635 = vcmp.eq.s32.totalorder %v86, %v411
    %vm636 = vcmp.eq.s32.totalorder %v87, %v383
    %vm637 = vcmp.eq.s32.totalorder %v87, %v387
    %vm638 = vcmp.eq.s32.totalorder %v87, %v391
    %vm639 = vcmp.eq.s32.totalorder %v87, %v395
    %vm640 = vcmp.eq.s32.totalorder %v87, %v399
    %vm641 = vcmp.eq.s32.totalorder %v87, %v403
    %vm642 = vcmp.eq.s32.totalorder %v87, %v407
    %vm643 = vcmp.eq.s32.totalorder %v87, %v411
    %vm644 = vcmp.eq.s32.totalorder %v88, %v383
    %vm645 = vcmp.eq.s32.totalorder %v88, %v387
    %vm646 = vcmp.eq.s32.totalorder %v88, %v391
    %vm647 = vcmp.eq.s32.totalorder %v88, %v395
    %vm648 = vcmp.eq.s32.totalorder %v88, %v399
    %vm649 = vcmp.eq.s32.totalorder %v88, %v403
    %vm650 = vcmp.eq.s32.totalorder %v88, %v407
    %vm651 = vcmp.eq.s32.totalorder %v88, %v411
    %vm652 = vcmp.eq.s32.totalorder %v89, %v383
    %vm653 = vcmp.eq.s32.totalorder %v89, %v387
    %vm654 = vcmp.eq.s32.totalorder %v89, %v391
    %vm655 = vcmp.eq.s32.totalorder %v89, %v395
    %vm656 = vcmp.eq.s32.totalorder %v89, %v399
    %vm657 = vcmp.eq.s32.totalorder %v89, %v403
    %vm658 = vcmp.eq.s32.totalorder %v89, %v407
    %vm659 = vcmp.eq.s32.totalorder %v89, %v411
    %vm660 = vcmp.eq.s32.totalorder %v90, %v383
    %vm661 = vcmp.eq.s32.totalorder %v90, %v387
    %vm662 = vcmp.eq.s32.totalorder %v90, %v391
    %vm663 = vcmp.eq.s32.totalorder %v90, %v395
    %vm664 = vcmp.eq.s32.totalorder %v90, %v399
    %vm665 = vcmp.eq.s32.totalorder %v90, %v403
    %vm666 = vcmp.eq.s32.totalorder %v90, %v407
    %vm667 = vcmp.eq.s32.totalorder %v90, %v411
    %vm668 = vmor %vm123, %vm412
    %vm669 = vmor %vm124, %vm413
    %vm670 = vmor %vm125, %vm414
    %vm671 = vmor %vm126, %vm415
    %vm672 = vmor %vm127, %vm416
    %vm673 = vmor %vm128, %vm417
    %vm674 = vmor %vm129, %vm418
    %vm675 = vmor %vm130, %vm419
    %vm676 = vmor %vm131, %vm420
    %vm677 = vmor %vm132, %vm421
    %vm678 = vmor %vm133, %vm422
    %vm679 = vmor %vm134, %vm423
    %vm680 = vmor %vm135, %vm424
    %vm681 = vmor %vm136, %vm425
    %vm682 = vmor %vm137, %vm426
    %vm683 = vmor %vm138, %vm427
    %vm684 = vmor %vm139, %vm428
    %vm685 = vmor %vm140, %vm429
    %vm686 = vmor %vm141, %vm430
    %vm687 = vmor %vm142, %vm431
    %vm688 = vmor %vm143, %vm432
    %vm689 = vmor %vm144, %vm433
    %vm690 = vmor %vm145, %vm434
    %vm691 = vmor %vm146, %vm435
    %vm692 = vmor %vm147, %vm436
    %vm693 = vmor %vm148, %vm437
    %vm694 = vmor %vm149, %vm438
    %vm695 = vmor %vm150, %vm439
    %vm696 = vmor %vm151, %vm440
    %vm697 = vmor %vm152, %vm441
    %vm698 = vmor %vm153, %vm442
    %vm699 = vmor %vm154, %vm443
    %vm700 = vmor %vm155, %vm444
    %vm701 = vmor %vm156, %vm445
    %vm702 = vmor %vm157, %vm446
    %vm703 = vmor %vm158, %vm447
    %vm704 = vmor %vm159, %vm448
    %vm705 = vmor %vm160, %vm449
    %vm706 = vmor %vm161, %vm450
    %vm707 = vmor %vm162, %vm451
    %vm708 = vmor %vm163, %vm452
    %vm709 = vmor %vm164, %vm453
    %vm710 = vmor %vm165, %vm454
    %vm711 = vmor %vm166, %vm455
    %vm712 = vmor %vm167, %vm456
    %vm713 = vmor %vm168, %vm457
    %vm714 = vmor %vm169, %vm458
    %vm715 = vmor %vm170, %vm459
    %vm716 = vmor %vm171, %vm460
    %vm717 = vmor %vm172, %vm461
    %vm718 = vmor %vm173, %vm462
    %vm719 = vmor %vm174, %vm463
    %vm720 = vmor %vm175, %vm464
    %vm721 = vmor %vm176, %vm465
    %vm722 = vmor %vm177, %vm466
    %vm723 = vmor %vm178, %vm467
    %vm724 = vmor %vm179, %vm468
    %vm725 = vmor %vm180, %vm469
    %vm726 = vmor %vm181, %vm470
    %vm727 = vmor %vm182, %vm471
    %vm728 = vmor %vm183, %vm472
    %vm729 = vmor %vm184, %vm473
    %vm730 = vmor %vm185, %vm474
    %vm731 = vmor %vm186, %vm475
    %vm732 = vmor %vm187, %vm476
    %vm733 = vmor %vm188, %vm477
    %vm734 = vmor %vm189, %vm478
    %vm735 = vmor %vm190, %vm479
    %vm736 = vmor %vm191, %vm480
    %vm737 = vmor %vm192, %vm481
    %vm738 = vmor %vm193, %vm482
    %vm739 = vmor %vm194, %vm483
    %vm740 = vmor %vm195, %vm484
    %vm741 = vmor %vm196, %vm485
    %vm742 = vmor %vm197, %vm486
    %vm743 = vmor %vm198, %vm487
    %vm744 = vmor %vm199, %vm488
    %vm745 = vmor %vm200, %vm489
    %vm746 = vmor %vm201, %vm490
    %vm747 = vmor %vm202, %vm491
    %vm748 = vmor %vm203, %vm492
    %vm749 = vmor %vm204, %vm493
    %vm750 = vmor %vm205, %vm494
    %vm751 = vmor %vm206, %vm495
    %vm752 = vmor %vm207, %vm496
    %vm753 = vmor %vm208, %vm497
    %vm754 = vmor %vm209, %vm498
    %vm755 = vmor %vm210, %vm499
    %vm756 = vmor %vm211, %vm500
    %vm757 = vmor %vm212, %vm501
    %vm758 = vmor %vm213, %vm502
    %vm759 = vmor %vm214, %vm503
    %vm760 = vmor %vm215, %vm504
    %vm761 = vmor %vm216, %vm505
    %vm762 = vmor %vm217, %vm506
    %vm763 = vmor %vm218, %vm507
    %vm764 = vmor %vm219, %vm508
    %vm765 = vmor %vm220, %vm509
    %vm766 = vmor %vm221, %vm510
    %vm767 = vmor %vm222, %vm511
    %vm768 = vmor %vm223, %vm512
    %vm769 = vmor %vm224, %vm513
    %vm770 = vmor %vm225, %vm514
    %vm771 = vmor %vm226, %vm515
    %vm772 = vmor %vm227, %vm516
    %vm773 = vmor %vm228, %vm517
    %vm774 = vmor %vm229, %vm518
    %vm775 = vmor %vm230, %vm519
    %vm776 = vmor %vm231, %vm520
    %vm777 = vmor %vm232, %vm521
    %vm778 = vmor %vm233, %vm522
    %vm779 = vmor %vm234, %vm523
    %vm780 = vmor %vm235, %vm524
    %vm781 = vmor %vm236, %vm525
    %vm782 = vmor %vm237, %vm526
    %vm783 = vmor %vm238, %vm527
    %vm784 = vmor %vm239, %vm528
    %vm785 = vmor %vm240, %vm529
    %vm786 = vmor %vm241, %vm530
    %vm787 = vmor %vm242, %vm531
    %vm788 = vmor %vm243, %vm532
    %vm789 = vmor %vm244, %vm533
    %vm790 = vmor %vm245, %vm534
    %vm791 = vmor %vm246, %vm535
    %vm792 = vmor %vm247, %vm536
    %vm793 = vmor %vm248, %vm537
    %vm794 = vmor %vm249, %vm538
    %vm795 = vmor %vm250, %vm539
    %vm796 = vmor %vm251, %vm540
    %vm797 = vmor %vm252, %vm541
    %vm798 = vmor %vm253, %vm542
    %vm799 = vmor %vm254, %vm543
    %vm800 = vmor %vm255, %vm544
    %vm801 = vmor %vm256, %vm545
    %vm802 = vmor %vm257, %vm546
    %vm803 = vmor %vm258, %vm547
    %vm804 = vmor %vm259, %vm548
    %vm805 = vmor %vm260, %vm549
    %vm806 = vmor %vm261, %vm550
    %vm807 = vmor %vm262, %vm551
    %vm808 = vmor %vm263, %vm552
    %vm809 = vmor %vm264, %vm553
    %vm810 = vmor %vm265, %vm554
    %vm811 = vmor %vm266, %vm555
    %vm812 = vmor %vm267, %vm556
    %vm813 = vmor %vm268, %vm557
    %vm814 = vmor %vm269, %vm558
    %vm815 = vmor %vm270, %vm559
    %vm816 = vmor %vm271, %vm560
    %vm817 = vmor %vm272, %vm561
    %vm818 = vmor %vm273, %vm562
    %vm819 = vmor %vm274, %vm563
    %vm820 = vmor %vm275, %vm564
    %vm821 = vmor %vm276, %vm565
    %vm822 = vmor %vm277, %vm566
    %vm823 = vmor %vm278, %vm567
    %vm824 = vmor %vm279, %vm568
    %vm825 = vmor %vm280, %vm569
    %vm826 = vmor %vm281, %vm570
    %vm827 = vmor %vm282, %vm571
    %vm828 = vmor %vm283, %vm572
    %vm829 = vmor %vm284, %vm573
    %vm830 = vmor %vm285, %vm574
    %vm831 = vmor %vm286, %vm575
    %vm832 = vmor %vm287, %vm576
    %vm833 = vmor %vm288, %vm577
    %vm834 = vmor %vm289, %vm578
    %vm835 = vmor %vm290, %vm579
    %vm836 = vmor %vm291, %vm580
    %vm837 = vmor %vm292, %vm581
    %vm838 = vmor %vm293, %vm582
    %vm839 = vmor %vm294, %vm583
    %vm840 = vmor %vm295, %vm584
    %vm841 = vmor %vm296, %vm585
    %vm842 = vmor %vm297, %vm586
    %vm843 = vmor %vm298, %vm587
    %vm844 = vmor %vm299, %vm588
    %vm845 = vmor %vm300, %vm589
    %vm846 = vmor %vm301, %vm590
    %vm847 = vmor %vm302, %vm591
    %vm848 = vmor %vm303, %vm592
    %vm849 = vmor %vm304, %vm593
    %vm850 = vmor %vm305, %vm594
    %vm851 = vmor %vm306, %vm595
    %vm852 = vmor %vm307, %vm596
    %vm853 = vmor %vm308, %vm597
    %vm854 = vmor %vm309, %vm598
    %vm855 = vmor %vm310, %vm599
    %vm856 = vmor %vm311, %vm600
    %vm857 = vmor %vm312, %vm601
    %vm858 = vmor %vm313, %vm602
    %vm859 = vmor %vm314, %vm603
    %vm860 = vmor %vm315, %vm604
    %vm861 = vmor %vm316, %vm605
    %vm862 = vmor %vm317, %vm606
    %vm863 = vmor %vm318, %vm607
    %vm864 = vmor %vm319, %vm608
    %vm865 = vmor %vm320, %vm609
    %vm866 = vmor %vm321, %vm610
    %vm867 = vmor %vm322, %vm611
    %vm868 = vmor %vm323, %vm612
    %vm869 = vmor %vm324, %vm613
    %vm870 = vmor %vm325, %vm614
    %vm871 = vmor %vm326, %vm615
    %vm872 = vmor %vm327, %vm616
    %vm873 = vmor %vm328, %vm617
    %vm874 = vmor %vm329, %vm618
    %vm875 = vmor %vm330, %vm619
    %vm876 = vmor %vm331, %vm620
    %vm877 = vmor %vm332, %vm621
    %vm878 = vmor %vm333, %vm622
    %vm879 = vmor %vm334, %vm623
    %vm880 = vmor %vm335, %vm624
    %vm881 = vmor %vm336, %vm625
    %vm882 = vmor %vm337, %vm626
    %vm883 = vmor %vm338, %vm627
    %vm884 = vmor %vm339, %vm628
    %vm885 = vmor %vm340, %vm629
    %vm886 = vmor %vm341, %vm630
    %vm887 = vmor %vm342, %vm631
    %vm888 = vmor %vm343, %vm632
    %vm889 = vmor %vm344, %vm633
    %vm890 = vmor %vm345, %vm634
    %vm891 = vmor %vm346, %vm635
    %vm892 = vmor %vm347, %vm636
    %vm893 = vmor %vm348, %vm637
    %vm894 = vmor %vm349, %vm638
    %vm895 = vmor %vm350, %vm639
    %vm896 = vmor %vm351, %vm640
    %vm897 = vmor %vm352, %vm641
    %vm898 = vmor %vm353, %vm642
    %vm899 = vmor %vm354, %vm643
    %vm900 = vmor %vm355, %vm644
    %vm901 = vmor %vm356, %vm645
    %vm902 = vmor %vm357, %vm646
    %vm903 = vmor %vm358, %vm647
    %vm904 = vmor %vm359, %vm648
    %vm905 = vmor %vm360, %vm649
    %vm906 = vmor %vm361, %vm650
    %vm907 = vmor %vm362, %vm651
    %vm908 = vmor %vm363, %vm652
    %vm909 = vmor %vm364, %vm653
    %vm910 = vmor %vm365, %vm654
    %vm911 = vmor %vm366, %vm655
    %vm912 = vmor %vm367, %vm656
    %vm913 = vmor %vm368, %vm657
    %vm914 = vmor %vm369, %vm658
    %vm915 = vmor %vm370, %vm659
    %vm916 = vmor %vm371, %vm660
    %vm917 = vmor %vm372, %vm661
    %vm918 = vmor %vm373, %vm662
    %vm919 = vmor %vm374, %vm663
    %vm920 = vmor %vm375, %vm664
    %vm921 = vmor %vm376, %vm665
    %vm922 = vmor %vm377, %vm666
    %vm923 = vmor %vm378, %vm667
    %v924 = vsel %vm668, 1, 0
    %v925 = vsel %vm669, 1, 0
    %v926 = vsel %vm670, 1, 0
    %v927 = vsel %vm671, 1, 0
    %v928 = vsel %vm672, 1, 0
    %v929 = vsel %vm673, 1, 0
    %v930 = vsel %vm674, 1, 0
    %v931 = vsel %vm675, 1, 0
    %v932 = vsel %vm676, 1, 0
    %v933 = vsel %vm677, 1, 0
    %v934 = vsel %vm678, 1, 0
    %v935 = vsel %vm679, 1, 0
    %v936 = vsel %vm680, 1, 0
    %v937 = vsel %vm681, 1, 0
    %v938 = vsel %vm682, 1, 0
    %v939 = vsel %vm683, 1, 0
    %v940 = vsel %vm684, 1, 0
    %v941 = vsel %vm685, 1, 0
    %v942 = vsel %vm686, 1, 0
    %v943 = vsel %vm687, 1, 0
    %v944 = vsel %vm688, 1, 0
    %v945 = vsel %vm689, 1, 0
    %v946 = vsel %vm690, 1, 0
    %v947 = vsel %vm691, 1, 0
    %v948 = vsel %vm692, 1, 0
    %v949 = vsel %vm693, 1, 0
    %v950 = vsel %vm694, 1, 0
    %v951 = vsel %vm695, 1, 0
    %v952 = vsel %vm696, 1, 0
    %v953 = vsel %vm697, 1, 0
    %v954 = vsel %vm698, 1, 0
    %v955 = vsel %vm699, 1, 0
    %v956 = vsel %vm700, 1, 0
    %v957 = vsel %vm701, 1, 0
    %v958 = vsel %vm702, 1, 0
    %v959 = vsel %vm703, 1, 0
    %v960 = vsel %vm704, 1, 0
    %v961 = vsel %vm705, 1, 0
    %v962 = vsel %vm706, 1, 0
    %v963 = vsel %vm707, 1, 0
    %v964 = vsel %vm708, 1, 0
    %v965 = vsel %vm709, 1, 0
    %v966 = vsel %vm710, 1, 0
    %v967 = vsel %vm711, 1, 0
    %v968 = vsel %vm712, 1, 0
    %v969 = vsel %vm713, 1, 0
    %v970 = vsel %vm714, 1, 0
    %v971 = vsel %vm715, 1, 0
    %v972 = vsel %vm716, 1, 0
    %v973 = vsel %vm717, 1, 0
    %v974 = vsel %vm718, 1, 0
    %v975 = vsel %vm719, 1, 0
    %v976 = vsel %vm720, 1, 0
    %v977 = vsel %vm721, 1, 0
    %v978 = vsel %vm722, 1, 0
    %v979 = vsel %vm723, 1, 0
    %v980 = vsel %vm724, 1, 0
    %v981 = vsel %vm725, 1, 0
    %v982 = vsel %vm726, 1, 0
    %v983 = vsel %vm727, 1, 0
    %v984 = vsel %vm728, 1, 0
    %v985 = vsel %vm729, 1, 0
    %v986 = vsel %vm730, 1, 0
    %v987 = vsel %vm731, 1, 0
    %v988 = vsel %vm732, 1, 0
    %v989 = vsel %vm733, 1, 0
    %v990 = vsel %vm734, 1, 0
    %v991 = vsel %vm735, 1, 0
    %v992 = vsel %vm736, 1, 0
    %v993 = vsel %vm737, 1, 0
    %v994 = vsel %vm738, 1, 0
    %v995 = vsel %vm739, 1, 0
    %v996 = vsel %vm740, 1, 0
    %v997 = vsel %vm741, 1, 0
    %v998 = vsel %vm742, 1, 0
    %v999 = vsel %vm743, 1, 0
    %v1000 = vsel %vm744, 1, 0
    %v1001 = vsel %vm745, 1, 0
    %v1002 = vsel %vm746, 1, 0
    %v1003 = vsel %vm747, 1, 0
    %v1004 = vsel %vm748, 1, 0
    %v1005 = vsel %vm749, 1, 0
    %v1006 = vsel %vm750, 1, 0
    %v1007 = vsel %vm751, 1, 0
    %v1008 = vsel %vm752, 1, 0
    %v1009 = vsel %vm753, 1, 0
    %v1010 = vsel %vm754, 1, 0
    %v1011 = vsel %vm755, 1, 0
    %v1012 = vsel %vm756, 1, 0
    %v1013 = vsel %vm757, 1, 0
    %v1014 = vsel %vm758, 1, 0
    %v1015 = vsel %vm759, 1, 0
    %v1016 = vsel %vm760, 1, 0
    %v1017 = vsel %vm761, 1, 0
    %v1018 = vsel %vm762, 1, 0
    %v1019 = vsel %vm763, 1, 0
    %v1020 = vsel %vm764, 1, 0
    %v1021 = vsel %vm765, 1, 0
    %v1022 = vsel %vm766, 1, 0
    %v1023 = vsel %vm767, 1, 0
    %v1024 = vsel %vm768, 1, 0
    %v1025 = vsel %vm769, 1, 0
    %v1026 = vsel %vm770, 1, 0
    %v1027 = vsel %vm771, 1, 0
    %v1028 = vsel %vm772, 1, 0
    %v1029 = vsel %vm773, 1, 0
    %v1030 = vsel %vm774, 1, 0
    %v1031 = vsel %vm775, 1, 0
    %v1032 = vsel %vm776, 1, 0
    %v1033 = vsel %vm777, 1, 0
    %v1034 = vsel %vm778, 1, 0
    %v1035 = vsel %vm779, 1, 0
    %v1036 = vsel %vm780, 1, 0
    %v1037 = vsel %vm781, 1, 0
    %v1038 = vsel %vm782, 1, 0
    %v1039 = vsel %vm783, 1, 0
    %v1040 = vsel %vm784, 1, 0
    %v1041 = vsel %vm785, 1, 0
    %v1042 = vsel %vm786, 1, 0
    %v1043 = vsel %vm787, 1, 0
    %v1044 = vsel %vm788, 1, 0
    %v1045 = vsel %vm789, 1, 0
    %v1046 = vsel %vm790, 1, 0
    %v1047 = vsel %vm791, 1, 0
    %v1048 = vsel %vm792, 1, 0
    %v1049 = vsel %vm793, 1, 0
    %v1050 = vsel %vm794, 1, 0
    %v1051 = vsel %vm795, 1, 0
    %v1052 = vsel %vm796, 1, 0
    %v1053 = vsel %vm797, 1, 0
    %v1054 = vsel %vm798, 1, 0
    %v1055 = vsel %vm799, 1, 0
    %v1056 = vsel %vm800, 1, 0
    %v1057 = vsel %vm801, 1, 0
    %v1058 = vsel %vm802, 1, 0
    %v1059 = vsel %vm803, 1, 0
    %v1060 = vsel %vm804, 1, 0
    %v1061 = vsel %vm805, 1, 0
    %v1062 = vsel %vm806, 1, 0
    %v1063 = vsel %vm807, 1, 0
    %v1064 = vsel %vm808, 1, 0
    %v1065 = vsel %vm809, 1, 0
    %v1066 = vsel %vm810, 1, 0
    %v1067 = vsel %vm811, 1, 0
    %v1068 = vsel %vm812, 1, 0
    %v1069 = vsel %vm813, 1, 0
    %v1070 = vsel %vm814, 1, 0
    %v1071 = vsel %vm815, 1, 0
    %v1072 = vsel %vm816, 1, 0
    %v1073 = vsel %vm817, 1, 0
    %v1074 = vsel %vm818, 1, 0
    %v1075 = vsel %vm819, 1, 0
    %v1076 = vsel %vm820, 1, 0
    %v1077 = vsel %vm821, 1, 0
    %v1078 = vsel %vm822, 1, 0
    %v1079 = vsel %vm823, 1, 0
    %v1080 = vsel %vm824, 1, 0
    %v1081 = vsel %vm825, 1, 0
    %v1082 = vsel %vm826, 1, 0
    %v1083 = vsel %vm827, 1, 0
    %v1084 = vsel %vm828, 1, 0
    %v1085 = vsel %vm829, 1, 0
    %v1086 = vsel %vm830, 1, 0
    %v1087 = vsel %vm831, 1, 0
    %v1088 = vsel %vm832, 1, 0
    %v1089 = vsel %vm833, 1, 0
    %v1090 = vsel %vm834, 1, 0
    %v1091 = vsel %vm835, 1, 0
    %v1092 = vsel %vm836, 1, 0
    %v1093 = vsel %vm837, 1, 0
    %v1094 = vsel %vm838, 1, 0
    %v1095 = vsel %vm839, 1, 0
    %v1096 = vsel %vm840, 1, 0
    %v1097 = vsel %vm841, 1, 0
    %v1098 = vsel %vm842, 1, 0
    %v1099 = vsel %vm843, 1, 0
    %v1100 = vsel %vm844, 1, 0
    %v1101 = vsel %vm845, 1, 0
    %v1102 = vsel %vm846, 1, 0
    %v1103 = vsel %vm847, 1, 0
    %v1104 = vsel %vm848, 1, 0
    %v1105 = vsel %vm849, 1, 0
    %v1106 = vsel %vm850, 1, 0
    %v1107 = vsel %vm851, 1, 0
    %v1108 = vsel %vm852, 1, 0
    %v1109 = vsel %vm853, 1, 0
    %v1110 = vsel %vm854, 1, 0
    %v1111 = vsel %vm855, 1, 0
    %v1112 = vsel %vm856, 1, 0
    %v1113 = vsel %vm857, 1, 0
    %v1114 = vsel %vm858, 1, 0
    %v1115 = vsel %vm859, 1, 0
    %v1116 = vsel %vm860, 1, 0
    %v1117 = vsel %vm861, 1, 0
    %v1118 = vsel %vm862, 1, 0
    %v1119 = vsel %vm863, 1, 0
    %v1120 = vsel %vm864, 1, 0
    %v1121 = vsel %vm865, 1, 0
    %v1122 = vsel %vm866, 1, 0
    %v1123 = vsel %vm867, 1, 0
    %v1124 = vsel %vm868, 1, 0
    %v1125 = vsel %vm869, 1, 0
    %v1126 = vsel %vm870, 1, 0
    %v1127 = vsel %vm871, 1, 0
    %v1128 = vsel %vm872, 1, 0
    %v1129 = vsel %vm873, 1, 0
    %v1130 = vsel %vm874, 1, 0
    %v1131 = vsel %vm875, 1, 0
    %v1132 = vsel %vm876, 1, 0
    %v1133 = vsel %vm877, 1, 0
    %v1134 = vsel %vm878, 1, 0
    %v1135 = vsel %vm879, 1, 0
    %v1136 = vsel %vm880, 1, 0
    %v1137 = vsel %vm881, 1, 0
    %v1138 = vsel %vm882, 1, 0
    %v1139 = vsel %vm883, 1, 0
    %v1140 = vsel %vm884, 1, 0
    %v1141 = vsel %vm885, 1, 0
    %v1142 = vsel %vm886, 1, 0
    %v1143 = vsel %vm887, 1, 0
    %v1144 = vsel %vm888, 1, 0
    %v1145 = vsel %vm889, 1, 0
    %v1146 = vsel %vm890, 1, 0
    %v1147 = vsel %vm891, 1, 0
    %v1148 = vsel %vm892, 1, 0
    %v1149 = vsel %vm893, 1, 0
    %v1150 = vsel %vm894, 1, 0
    %v1151 = vsel %vm895, 1, 0
    %v1152 = vsel %vm896, 1, 0
    %v1153 = vsel %vm897, 1, 0
    %v1154 = vsel %vm898, 1, 0
    %v1155 = vsel %vm899, 1, 0
    %v1156 = vsel %vm900, 1, 0
    %v1157 = vsel %vm901, 1, 0
    %v1158 = vsel %vm902, 1, 0
    %v1159 = vsel %vm903, 1, 0
    %v1160 = vsel %vm904, 1, 0
    %v1161 = vsel %vm905, 1, 0
    %v1162 = vsel %vm906, 1, 0
    %v1163 = vsel %vm907, 1, 0
    %v1164 = vsel %vm908, 1, 0
    %v1165 = vsel %vm909, 1, 0
    %v1166 = vsel %vm910, 1, 0
    %v1167 = vsel %vm911, 1, 0
    %v1168 = vsel %vm912, 1, 0
    %v1169 = vsel %vm913, 1, 0
    %v1170 = vsel %vm914, 1, 0
    %v1171 = vsel %vm915, 1, 0
    %v1172 = vsel %vm916, 1, 0
    %v1173 = vsel %vm917, 1, 0
    %v1174 = vsel %vm918, 1, 0
    %v1175 = vsel %vm919, 1, 0
    %v1176 = vsel %vm920, 1, 0
    %v1177 = vsel %vm921, 1, 0
    %v1178 = vsel %vm922, 1, 0
    %v1179 = vsel %vm923, 1, 0
    %v1180 = vcvt.s32.f32 %v924
    %v1181 = vcvt.s32.f32 %v925
    %v1182 = vcvt.s32.f32 %v926
    %v1183 = vcvt.s32.f32 %v927
    %v1184 = vcvt.s32.f32 %v928
    %v1185 = vcvt.s32.f32 %v929
    %v1186 = vcvt.s32.f32 %v930
    %v1187 = vcvt.s32.f32 %v931
    %v1188 = vcvt.s32.f32 %v932
    %v1189 = vcvt.s32.f32 %v933
    %v1190 = vcvt.s32.f32 %v934
    %v1191 = vcvt.s32.f32 %v935
    %v1192 = vcvt.s32.f32 %v936
    %v1193 = vcvt.s32.f32 %v937
    %v1194 = vcvt.s32.f32 %v938
    %v1195 = vcvt.s32.f32 %v939
    %v1196 = vcvt.s32.f32 %v940
    %v1197 = vcvt.s32.f32 %v941
    %v1198 = vcvt.s32.f32 %v942
    %v1199 = vcvt.s32.f32 %v943
    %v1200 = vcvt.s32.f32 %v944
    %v1201 = vcvt.s32.f32 %v945
    %v1202 = vcvt.s32.f32 %v946
    %v1203 = vcvt.s32.f32 %v947
    %v1204 = vcvt.s32.f32 %v948
    %v1205 = vcvt.s32.f32 %v949
    %v1206 = vcvt.s32.f32 %v950
    %v1207 = vcvt.s32.f32 %v951
    %v1208 = vcvt.s32.f32 %v952
    %v1209 = vcvt.s32.f32 %v953
    %v1210 = vcvt.s32.f32 %v954
    %v1211 = vcvt.s32.f32 %v955
    %v1212 = vcvt.s32.f32 %v956
    %v1213 = vcvt.s32.f32 %v957
    %v1214 = vcvt.s32.f32 %v958
    %v1215 = vcvt.s32.f32 %v959
    %v1216 = vcvt.s32.f32 %v960
    %v1217 = vcvt.s32.f32 %v961
    %v1218 = vcvt.s32.f32 %v962
    %v1219 = vcvt.s32.f32 %v963
    %v1220 = vcvt.s32.f32 %v964
    %v1221 = vcvt.s32.f32 %v965
    %v1222 = vcvt.s32.f32 %v966
    %v1223 = vcvt.s32.f32 %v967
    %v1224 = vcvt.s32.f32 %v968
    %v1225 = vcvt.s32.f32 %v969
    %v1226 = vcvt.s32.f32 %v970
    %v1227 = vcvt.s32.f32 %v971
    %v1228 = vcvt.s32.f32 %v972
    %v1229 = vcvt.s32.f32 %v973
    %v1230 = vcvt.s32.f32 %v974
    %v1231 = vcvt.s32.f32 %v975
    %v1232 = vcvt.s32.f32 %v976
    %v1233 = vcvt.s32.f32 %v977
    %v1234 = vcvt.s32.f32 %v978
    %v1235 = vcvt.s32.f32 %v979
    %v1236 = vcvt.s32.f32 %v980
    %v1237 = vcvt.s32.f32 %v981
    %v1238 = vcvt.s32.f32 %v982
    %v1239 = vcvt.s32.f32 %v983
    %v1240 = vcvt.s32.f32 %v984
    %v1241 = vcvt.s32.f32 %v985
    %v1242 = vcvt.s32.f32 %v986
    %v1243 = vcvt.s32.f32 %v987
    %v1244 = vcvt.s32.f32 %v988
    %v1245 = vcvt.s32.f32 %v989
    %v1246 = vcvt.s32.f32 %v990
    %v1247 = vcvt.s32.f32 %v991
    %v1248 = vcvt.s32.f32 %v992
    %v1249 = vcvt.s32.f32 %v993
    %v1250 = vcvt.s32.f32 %v994
    %v1251 = vcvt.s32.f32 %v995
    %v1252 = vcvt.s32.f32 %v996
    %v1253 = vcvt.s32.f32 %v997
    %v1254 = vcvt.s32.f32 %v998
    %v1255 = vcvt.s32.f32 %v999
    %v1256 = vcvt.s32.f32 %v1000
    %v1257 = vcvt.s32.f32 %v1001
    %v1258 = vcvt.s32.f32 %v1002
    %v1259 = vcvt.s32.f32 %v1003
    %v1260 = vcvt.s32.f32 %v1004
    %v1261 = vcvt.s32.f32 %v1005
    %v1262 = vcvt.s32.f32 %v1006
    %v1263 = vcvt.s32.f32 %v1007
    %v1264 = vcvt.s32.f32 %v1008
    %v1265 = vcvt.s32.f32 %v1009
    %v1266 = vcvt.s32.f32 %v1010
    %v1267 = vcvt.s32.f32 %v1011
    %v1268 = vcvt.s32.f32 %v1012
    %v1269 = vcvt.s32.f32 %v1013
    %v1270 = vcvt.s32.f32 %v1014
    %v1271 = vcvt.s32.f32 %v1015
    %v1272 = vcvt.s32.f32 %v1016
    %v1273 = vcvt.s32.f32 %v1017
    %v1274 = vcvt.s32.f32 %v1018
    %v1275 = vcvt.s32.f32 %v1019
    %v1276 = vcvt.s32.f32 %v1020
    %v1277 = vcvt.s32.f32 %v1021
    %v1278 = vcvt.s32.f32 %v1022
    %v1279 = vcvt.s32.f32 %v1023
    %v1280 = vcvt.s32.f32 %v1024
    %v1281 = vcvt.s32.f32 %v1025
    %v1282 = vcvt.s32.f32 %v1026
    %v1283 = vcvt.s32.f32 %v1027
    %v1284 = vcvt.s32.f32 %v1028
    %v1285 = vcvt.s32.f32 %v1029
    %v1286 = vcvt.s32.f32 %v1030
    %v1287 = vcvt.s32.f32 %v1031
    %v1288 = vcvt.s32.f32 %v1032
    %v1289 = vcvt.s32.f32 %v1033
    %v1290 = vcvt.s32.f32 %v1034
    %v1291 = vcvt.s32.f32 %v1035
    %v1292 = vcvt.s32.f32 %v1036
    %v1293 = vcvt.s32.f32 %v1037
    %v1294 = vcvt.s32.f32 %v1038
    %v1295 = vcvt.s32.f32 %v1039
    %v1296 = vcvt.s32.f32 %v1040
    %v1297 = vcvt.s32.f32 %v1041
    %v1298 = vcvt.s32.f32 %v1042
    %v1299 = vcvt.s32.f32 %v1043
    %v1300 = vcvt.s32.f32 %v1044
    %v1301 = vcvt.s32.f32 %v1045
    %v1302 = vcvt.s32.f32 %v1046
    %v1303 = vcvt.s32.f32 %v1047
    %v1304 = vcvt.s32.f32 %v1048
    %v1305 = vcvt.s32.f32 %v1049
    %v1306 = vcvt.s32.f32 %v1050
    %v1307 = vcvt.s32.f32 %v1051
    %v1308 = vcvt.s32.f32 %v1052
    %v1309 = vcvt.s32.f32 %v1053
    %v1310 = vcvt.s32.f32 %v1054
    %v1311 = vcvt.s32.f32 %v1055
    %v1312 = vcvt.s32.f32 %v1056
    %v1313 = vcvt.s32.f32 %v1057
    %v1314 = vcvt.s32.f32 %v1058
    %v1315 = vcvt.s32.f32 %v1059
    %v1316 = vcvt.s32.f32 %v1060
    %v1317 = vcvt.s32.f32 %v1061
    %v1318 = vcvt.s32.f32 %v1062
    %v1319 = vcvt.s32.f32 %v1063
    %v1320 = vcvt.s32.f32 %v1064
    %v1321 = vcvt.s32.f32 %v1065
    %v1322 = vcvt.s32.f32 %v1066
    %v1323 = vcvt.s32.f32 %v1067
    %v1324 = vcvt.s32.f32 %v1068
    %v1325 = vcvt.s32.f32 %v1069
    %v1326 = vcvt.s32.f32 %v1070
    %v1327 = vcvt.s32.f32 %v1071
    %v1328 = vcvt.s32.f32 %v1072
    %v1329 = vcvt.s32.f32 %v1073
    %v1330 = vcvt.s32.f32 %v1074
    %v1331 = vcvt.s32.f32 %v1075
    %v1332 = vcvt.s32.f32 %v1076
    %v1333 = vcvt.s32.f32 %v1077
    %v1334 = vcvt.s32.f32 %v1078
    %v1335 = vcvt.s32.f32 %v1079
    %v1336 = vcvt.s32.f32 %v1080
    %v1337 = vcvt.s32.f32 %v1081
    %v1338 = vcvt.s32.f32 %v1082
    %v1339 = vcvt.s32.f32 %v1083
    %v1340 = vcvt.s32.f32 %v1084
    %v1341 = vcvt.s32.f32 %v1085
    %v1342 = vcvt.s32.f32 %v1086
    %v1343 = vcvt.s32.f32 %v1087
    %v1344 = vcvt.s32.f32 %v1088
    %v1345 = vcvt.s32.f32 %v1089
    %v1346 = vcvt.s32.f32 %v1090
    %v1347 = vcvt.s32.f32 %v1091
    %v1348 = vcvt.s32.f32 %v1092
    %v1349 = vcvt.s32.f32 %v1093
    %v1350 = vcvt.s32.f32 %v1094
    %v1351 = vcvt.s32.f32 %v1095
    %v1352 = vcvt.s32.f32 %v1096
    %v1353 = vcvt.s32.f32 %v1097
    %v1354 = vcvt.s32.f32 %v1098
    %v1355 = vcvt.s32.f32 %v1099
    %v1356 = vcvt.s32.f32 %v1100
    %v1357 = vcvt.s32.f32 %v1101
    %v1358 = vcvt.s32.f32 %v1102
    %v1359 = vcvt.s32.f32 %v1103
    %v1360 = vcvt.s32.f32 %v1104
    %v1361 = vcvt.s32.f32 %v1105
    %v1362 = vcvt.s32.f32 %v1106
    %v1363 = vcvt.s32.f32 %v1107
    %v1364 = vcvt.s32.f32 %v1108
    %v1365 = vcvt.s32.f32 %v1109
    %v1366 = vcvt.s32.f32 %v1110
    %v1367 = vcvt.s32.f32 %v1111
    %v1368 = vcvt.s32.f32 %v1112
    %v1369 = vcvt.s32.f32 %v1113
    %v1370 = vcvt.s32.f32 %v1114
    %v1371 = vcvt.s32.f32 %v1115
    %v1372 = vcvt.s32.f32 %v1116
    %v1373 = vcvt.s32.f32 %v1117
    %v1374 = vcvt.s32.f32 %v1118
    %v1375 = vcvt.s32.f32 %v1119
    %v1376 = vcvt.s32.f32 %v1120
    %v1377 = vcvt.s32.f32 %v1121
    %v1378 = vcvt.s32.f32 %v1122
    %v1379 = vcvt.s32.f32 %v1123
    %v1380 = vcvt.s32.f32 %v1124
    %v1381 = vcvt.s32.f32 %v1125
    %v1382 = vcvt.s32.f32 %v1126
    %v1383 = vcvt.s32.f32 %v1127
    %v1384 = vcvt.s32.f32 %v1128
    %v1385 = vcvt.s32.f32 %v1129
    %v1386 = vcvt.s32.f32 %v1130
    %v1387 = vcvt.s32.f32 %v1131
    %v1388 = vcvt.s32.f32 %v1132
    %v1389 = vcvt.s32.f32 %v1133
    %v1390 = vcvt.s32.f32 %v1134
    %v1391 = vcvt.s32.f32 %v1135
    %v1392 = vcvt.s32.f32 %v1136
    %v1393 = vcvt.s32.f32 %v1137
    %v1394 = vcvt.s32.f32 %v1138
    %v1395 = vcvt.s32.f32 %v1139
    %v1396 = vcvt.s32.f32 %v1140
    %v1397 = vcvt.s32.f32 %v1141
    %v1398 = vcvt.s32.f32 %v1142
    %v1399 = vcvt.s32.f32 %v1143
    %v1400 = vcvt.s32.f32 %v1144
    %v1401 = vcvt.s32.f32 %v1145
    %v1402 = vcvt.s32.f32 %v1146
    %v1403 = vcvt.s32.f32 %v1147
    %v1404 = vcvt.s32.f32 %v1148
    %v1405 = vcvt.s32.f32 %v1149
    %v1406 = vcvt.s32.f32 %v1150
    %v1407 = vcvt.s32.f32 %v1151
    %v1408 = vcvt.s32.f32 %v1152
    %v1409 = vcvt.s32.f32 %v1153
    %v1410 = vcvt.s32.f32 %v1154
    %v1411 = vcvt.s32.f32 %v1155
    %v1412 = vcvt.s32.f32 %v1156
    %v1413 = vcvt.s32.f32 %v1157
    %v1414 = vcvt.s32.f32 %v1158
    %v1415 = vcvt.s32.f32 %v1159
    %v1416 = vcvt.s32.f32 %v1160
    %v1417 = vcvt.s32.f32 %v1161
    %v1418 = vcvt.s32.f32 %v1162
    %v1419 = vcvt.s32.f32 %v1163
    %v1420 = vcvt.s32.f32 %v1164
    %v1421 = vcvt.s32.f32 %v1165
    %v1422 = vcvt.s32.f32 %v1166
    %v1423 = vcvt.s32.f32 %v1167
    %v1424 = vcvt.s32.f32 %v1168
    %v1425 = vcvt.s32.f32 %v1169
    %v1426 = vcvt.s32.f32 %v1170
    %v1427 = vcvt.s32.f32 %v1171
    %v1428 = vcvt.s32.f32 %v1172
    %v1429 = vcvt.s32.f32 %v1173
    %v1430 = vcvt.s32.f32 %v1174
    %v1431 = vcvt.s32.f32 %v1175
    %v1432 = vcvt.s32.f32 %v1176
    %v1433 = vcvt.s32.f32 %v1177
    %v1434 = vcvt.s32.f32 %v1178
    %v1435 = vcvt.s32.f32 %v1179
    %v1436 = vld [vmem:[#allocation8] sm:$0xff]
    %v1437 = vld [vmem:[#allocation8 + $0x8] sm:$0xff]
    %v1438 = vld [vmem:[#allocation8 + $0x10] sm:$0xff]
    %v1439 = vld [vmem:[#allocation8 + $0x18] sm:$0xff]
    %v1440 = vld [vmem:[#allocation8 + $0x20] sm:$0xff]
    %v1441 = vld [vmem:[#allocation8 + $0x28] sm:$0xff]
    %v1442 = vld [vmem:[#allocation8 + $0x30] sm:$0xff]
    %v1443 = vld [vmem:[#allocation8 + $0x38] sm:$0xff]
    %v1444 = vld [vmem:[#allocation8 + $0x40] sm:$0xff]
    %v1445 = vld [vmem:[#allocation8 + $0x48] sm:$0xff]
    %v1446 = vld [vmem:[#allocation8 + $0x50] sm:$0xff]
    %v1447 = vld [vmem:[#allocation8 + $0x58] sm:$0xff]
    %v1448 = vld [vmem:[#allocation8 + $0x60] sm:$0xff]
    %v1449 = vld [vmem:[#allocation8 + $0x68] sm:$0xff]
    %v1450 = vld [vmem:[#allocation8 + $0x70] sm:$0xff]
    %v1451 = vld [vmem:[#allocation8 + $0x78] sm:$0xff]
    %1452 = vmatprep.subr.mxu0 %v1301
    %1453 = vmatpush1.msra.mxu0 %v1300
    %1454 = vmatprep.subr.mxu0 %v1293
    %1455 = vmatpush1.msra.mxu0 %v1292
    %1456 = vmatprep.subr.mxu0 %v1285
    %1457 = vmatpush1.msra.mxu0 %v1284
    %1458 = vmatprep.subr.mxu0 %v1277
    %1459 = vmatpush1.msra.mxu0 %v1276
    %1460 = vmatprep.subr.mxu0 %v1269
    %1461 = vmatpush1.msra.mxu0 %v1268
    %1462 = vmatprep.subr.mxu0 %v1261
    %1463 = vmatpush1.msra.mxu0 %v1260
    %1464 = vmatprep.subr.mxu0 %v1253
    %1465 = vmatpush1.msra.mxu0 %v1252
    %1466 = vmatprep.subr.mxu0 %v1245
    %1467 = vmatpush1.msra.mxu0 %v1244
    %1468 = vmatprep.subr.mxu0 %v1237
    %1469 = vmatpush1.msra.mxu0 %v1236
    %1470 = vmatprep.subr.mxu0 %v1229
    %1471 = vmatpush1.msra.mxu0 %v1228
    %1472 = vmatprep.subr.mxu0 %v1221
    %1473 = vmatpush1.msra.mxu0 %v1220
    %1474 = vmatprep.subr.mxu0 %v1213
    %1475 = vmatpush1.msra.mxu0 %v1212
    %1476 = vmatprep.subr.mxu0 %v1205
    %1477 = vmatpush1.msra.mxu0 %v1204
    %1478 = vmatprep.subr.mxu0 %v1197
    %1479 = vmatpush1.msra.mxu0 %v1196
    %1480 = vmatprep.subr.mxu0 %v1189
    %1481 = vmatpush1.msra.mxu0 %v1188
    %1482 = vmatprep.subr.mxu0 %v1181
    %1483 = vmatpush1.msra.mxu0 %v1180
    %1484 = vmatprep.subr.mxu0 %v1429
    %1485 = vmatpush2.msra.mxu0 %v1428
    %1486 = vmatprep.subr.mxu0 %v1421
    %1487 = vmatpush2.msra.mxu0 %v1420
    %1488 = vmatprep.subr.mxu0 %v1413
    %1489 = vmatpush2.msra.mxu0 %v1412
    %1490 = vmatprep.subr.mxu0 %v1405
    %1491 = vmatpush2.msra.mxu0 %v1404
    %1492 = vmatprep.subr.mxu0 %v1397
    %1493 = vmatpush2.msra.mxu0 %v1396
    %1494 = vmatprep.subr.mxu0 %v1389
    %1495 = vmatpush2.msra.mxu0 %v1388
    %1496 = vmatprep.subr.mxu0 %v1381
    %1497 = vmatpush2.msra.mxu0 %v1380
    %1498 = vmatprep.subr.mxu0 %v1373
    %1499 = vmatpush2.msra.mxu0 %v1372
    %1500 = vmatprep.subr.mxu0 %v1365
    %1501 = vmatpush2.msra.mxu0 %v1364
    %1502 = vmatprep.subr.mxu0 %v1357
    %1503 = vmatpush2.msra.mxu0 %v1356
    %1504 = vmatprep.subr.mxu0 %v1349
    %1505 = vmatpush2.msra.mxu0 %v1348
    %1506 = vmatprep.subr.mxu0 %v1341
    %1507 = vmatpush2.msra.mxu0 %v1340
    %1508 = vmatprep.subr.mxu0 %v1333
    %1509 = vmatpush2.msra.mxu0 %v1332
    %1510 = vmatprep.subr.mxu0 %v1325
    %1511 = vmatpush2.msra.mxu0 %v1324
    %1512 = vmatprep.subr.mxu0 %v1317
    %1513 = vmatpush2.msra.mxu0 %v1316
    %1514 = vmatprep.subr.mxu0 %v1309
    %1515 = vmatpush2.msra.mxu0 %v1308
    %1516 = vmatprep.mubr.f32.mxu0 %v1437
    %1517 = vmatmul.mubr.f32.gmra.mxu0 %v1436
    %v1518 = vpop.f32.mrf.mxu0
    %v1519 = vadd.f32 0.0, %v1518
    %v1520 = vpop.f32.mrf.mxu0
    %v1521 = vadd.f32 0.0, %v1520
    %1522 = vmatprep.mubr.f32.mxu0 %v1439
    %1523 = vmatmul.mubr.f32.gmra.mxu0 %v1438
    %v1524 = vpop.f32.mrf.mxu0
    %v1525 = vadd.f32 0.0, %v1524
    %v1526 = vpop.f32.mrf.mxu0
    %v1527 = vadd.f32 0.0, %v1526
    %1528 = vmatprep.mubr.f32.mxu0 %v1441
    %1529 = vmatmul.mubr.f32.gmra.mxu0 %v1440
    %v1530 = vpop.f32.mrf.mxu0
    %v1531 = vadd.f32 0.0, %v1530
    %v1532 = vpop.f32.mrf.mxu0
    %v1533 = vadd.f32 0.0, %v1532
    %1534 = vmatprep.mubr.f32.mxu0 %v1443
    %1535 = vmatmul.mubr.f32.gmra.mxu0 %v1442
    %v1536 = vpop.f32.mrf.mxu0
    %v1537 = vadd.f32 0.0, %v1536
    %v1538 = vpop.f32.mrf.mxu0
    %v1539 = vadd.f32 0.0, %v1538
    %1540 = vmatprep.mubr.f32.mxu0 %v1445
    %1541 = vmatmul.mubr.f32.gmra.mxu0 %v1444
    %v1542 = vpop.f32.mrf.mxu0
    %v1543 = vadd.f32 0.0, %v1542
    %v1544 = vpop.f32.mrf.mxu0
    %v1545 = vadd.f32 0.0, %v1544
    %1546 = vmatprep.mubr.f32.mxu0 %v1447
    %1547 = vmatmul.mubr.f32.gmra.mxu0 %v1446
    %v1548 = vpop.f32.mrf.mxu0
    %v1549 = vadd.f32 0.0, %v1548
    %v1550 = vpop.f32.mrf.mxu0
    %v1551 = vadd.f32 0.0, %v1550
    %1552 = vmatprep.mubr.f32.mxu0 %v1449
    %1553 = vmatmul.mubr.f32.gmra.mxu0 %v1448
    %v1554 = vpop.f32.mrf.mxu0
    %v1555 = vadd.f32 0.0, %v1554
    %v1556 = vpop.f32.mrf.mxu0
    %v1557 = vadd.f32 0.0, %v1556
    %1558 = vmatprep.mubr.f32.mxu0 %v1451
    %1559 = vmatmul.mubr.f32.gmra.mxu0 %v1450
    %v1560 = vpop.f32.mrf.mxu0
    %v1561 = vadd.f32 0.0, %v1560
    %v1562 = vpop.f32.mrf.mxu0
    %v1563 = vadd.f32 0.0, %v1562
    %1564 = vdwg.mxu0
    %1565 = vmatprep.subr.mxu0 %v1303
    %1566 = vmatpush1.msra.mxu0 %v1302
    %1567 = vmatprep.subr.mxu0 %v1295
    %1568 = vmatpush1.msra.mxu0 %v1294
    %1569 = vmatprep.subr.mxu0 %v1287
    %1570 = vmatpush1.msra.mxu0 %v1286
    %1571 = vmatprep.subr.mxu0 %v1279
    %1572 = vmatpush1.msra.mxu0 %v1278
    %1573 = vmatprep.subr.mxu0 %v1271
    %1574 = vmatpush1.msra.mxu0 %v1270
    %1575 = vmatprep.subr.mxu0 %v1263
    %1576 = vmatpush1.msra.mxu0 %v1262
    %1577 = vmatprep.subr.mxu0 %v1255
    %1578 = vmatpush1.msra.mxu0 %v1254
    %1579 = vmatprep.subr.mxu0 %v1247
    %1580 = vmatpush1.msra.mxu0 %v1246
    %1581 = vmatprep.subr.mxu0 %v1239
    %1582 = vmatpush1.msra.mxu0 %v1238
    %1583 = vmatprep.subr.mxu0 %v1231
    %1584 = vmatpush1.msra.mxu0 %v1230
    %1585 = vmatprep.subr.mxu0 %v1223
    %1586 = vmatpush1.msra.mxu0 %v1222
    %1587 = vmatprep.subr.mxu0 %v1215
    %1588 = vmatpush1.msra.mxu0 %v1214
    %1589 = vmatprep.subr.mxu0 %v1207
    %1590 = vmatpush1.msra.mxu0 %v1206
    %1591 = vmatprep.subr.mxu0 %v1199
    %1592 = vmatpush1.msra.mxu0 %v1198
    %1593 = vmatprep.subr.mxu0 %v1191
    %1594 = vmatpush1.msra.mxu0 %v1190
    %1595 = vmatprep.subr.mxu0 %v1183
    %1596 = vmatpush1.msra.mxu0 %v1182
    %1597 = vmatprep.subr.mxu0 %v1431
    %1598 = vmatpush2.msra.mxu0 %v1430
    %1599 = vmatprep.subr.mxu0 %v1423
    %1600 = vmatpush2.msra.mxu0 %v1422
    %1601 = vmatprep.subr.mxu0 %v1415
    %1602 = vmatpush2.msra.mxu0 %v1414
    %1603 = vmatprep.subr.mxu0 %v1407
    %1604 = vmatpush2.msra.mxu0 %v1406
    %1605 = vmatprep.subr.mxu0 %v1399
    %1606 = vmatpush2.msra.mxu0 %v1398
    %1607 = vmatprep.subr.mxu0 %v1391
    %1608 = vmatpush2.msra.mxu0 %v1390
    %1609 = vmatprep.subr.mxu0 %v1383
    %1610 = vmatpush2.msra.mxu0 %v1382
    %1611 = vmatprep.subr.mxu0 %v1375
    %1612 = vmatpush2.msra.mxu0 %v1374
    %1613 = vmatprep.subr.mxu0 %v1367
    %1614 = vmatpush2.msra.mxu0 %v1366
    %1615 = vmatprep.subr.mxu0 %v1359
    %1616 = vmatpush2.msra.mxu0 %v1358
    %1617 = vmatprep.subr.mxu0 %v1351
    %1618 = vmatpush2.msra.mxu0 %v1350
    %1619 = vmatprep.subr.mxu0 %v1343
    %1620 = vmatpush2.msra.mxu0 %v1342
    %1621 = vmatprep.subr.mxu0 %v1335
    %1622 = vmatpush2.msra.mxu0 %v1334
    %1623 = vmatprep.subr.mxu0 %v1327
    %1624 = vmatpush2.msra.mxu0 %v1326
    %1625 = vmatprep.subr.mxu0 %v1319
    %1626 = vmatpush2.msra.mxu0 %v1318
    %1627 = vmatprep.subr.mxu0 %v1311
    %1628 = vmatpush2.msra.mxu0 %v1310
    %1629 = vmatprep.mubr.f32.mxu0 %v1437
    %1630 = vmatmul.mubr.f32.gmra.mxu0 %v1436
    %v1631 = vpop.f32.mrf.mxu0
    %v1632 = vadd.f32 0.0, %v1631
    %v1633 = vpop.f32.mrf.mxu0
    %v1634 = vadd.f32 0.0, %v1633
    %1635 = vmatprep.mubr.f32.mxu0 %v1439
    %1636 = vmatmul.mubr.f32.gmra.mxu0 %v1438
    %v1637 = vpop.f32.mrf.mxu0
    %v1638 = vadd.f32 0.0, %v1637
    %v1639 = vpop.f32.mrf.mxu0
    %v1640 = vadd.f32 0.0, %v1639
    %1641 = vmatprep.mubr.f32.mxu0 %v1441
    %1642 = vmatmul.mubr.f32.gmra.mxu0 %v1440
    %v1643 = vpop.f32.mrf.mxu0
    %v1644 = vadd.f32 0.0, %v1643
    %v1645 = vpop.f32.mrf.mxu0
    %v1646 = vadd.f32 0.0, %v1645
    %1647 = vmatprep.mubr.f32.mxu0 %v1443
    %1648 = vmatmul.mubr.f32.gmra.mxu0 %v1442
    %v1649 = vpop.f32.mrf.mxu0
    %v1650 = vadd.f32 0.0, %v1649
    %v1651 = vpop.f32.mrf.mxu0
    %v1652 = vadd.f32 0.0, %v1651
    %1653 = vmatprep.mubr.f32.mxu0 %v1445
    %1654 = vmatmul.mubr.f32.gmra.mxu0 %v1444
    %v1655 = vpop.f32.mrf.mxu0
    %v1656 = vadd.f32 0.0, %v1655
    %v1657 = vpop.f32.mrf.mxu0
    %v1658 = vadd.f32 0.0, %v1657
    %1659 = vmatprep.mubr.f32.mxu0 %v1447
    %1660 = vmatmul.mubr.f32.gmra.mxu0 %v1446
    %v1661 = vpop.f32.mrf.mxu0
    %v1662 = vadd.f32 0.0, %v1661
    %v1663 = vpop.f32.mrf.mxu0
    %v1664 = vadd.f32 0.0, %v1663
    %1665 = vmatprep.mubr.f32.mxu0 %v1449
    %1666 = vmatmul.mubr.f32.gmra.mxu0 %v1448
    %v1667 = vpop.f32.mrf.mxu0
    %v1668 = vadd.f32 0.0, %v1667
    %v1669 = vpop.f32.mrf.mxu0
    %v1670 = vadd.f32 0.0, %v1669
    %1671 = vmatprep.mubr.f32.mxu0 %v1451
    %1672 = vmatmul.mubr.f32.gmra.mxu0 %v1450
    %v1673 = vpop.f32.mrf.mxu0
    %v1674 = vadd.f32 0.0, %v1673
    %v1675 = vpop.f32.mrf.mxu0
    %v1676 = vadd.f32 0.0, %v1675
    %1677 = vdwg.mxu0
    %1678 = vmatprep.subr.mxu0 %v1305
    %1679 = vmatpush1.msra.mxu0 %v1304
    %1680 = vmatprep.subr.mxu0 %v1297
    %1681 = vmatpush1.msra.mxu0 %v1296
    %1682 = vmatprep.subr.mxu0 %v1289
    %1683 = vmatpush1.msra.mxu0 %v1288
    %1684 = vmatprep.subr.mxu0 %v1281
    %1685 = vmatpush1.msra.mxu0 %v1280
    %1686 = vmatprep.subr.mxu0 %v1273
    %1687 = vmatpush1.msra.mxu0 %v1272
    %1688 = vmatprep.subr.mxu0 %v1265
    %1689 = vmatpush1.msra.mxu0 %v1264
    %1690 = vmatprep.subr.mxu0 %v1257
    %1691 = vmatpush1.msra.mxu0 %v1256
    %1692 = vmatprep.subr.mxu0 %v1249
    %1693 = vmatpush1.msra.mxu0 %v1248
    %1694 = vmatprep.subr.mxu0 %v1241
    %1695 = vmatpush1.msra.mxu0 %v1240
    %1696 = vmatprep.subr.mxu0 %v1233
    %1697 = vmatpush1.msra.mxu0 %v1232
    %1698 = vmatprep.subr.mxu0 %v1225
    %1699 = vmatpush1.msra.mxu0 %v1224
    %1700 = vmatprep.subr.mxu0 %v1217
    %1701 = vmatpush1.msra.mxu0 %v1216
    %1702 = vmatprep.subr.mxu0 %v1209
    %1703 = vmatpush1.msra.mxu0 %v1208
    %1704 = vmatprep.subr.mxu0 %v1201
    %1705 = vmatpush1.msra.mxu0 %v1200
    %1706 = vmatprep.subr.mxu0 %v1193
    %1707 = vmatpush1.msra.mxu0 %v1192
    %1708 = vmatprep.subr.mxu0 %v1185
    %1709 = vmatpush1.msra.mxu0 %v1184
    %1710 = vmatprep.subr.mxu0 %v1433
    %1711 = vmatpush2.msra.mxu0 %v1432
    %1712 = vmatprep.subr.mxu0 %v1425
    %1713 = vmatpush2.msra.mxu0 %v1424
    %1714 = vmatprep.subr.mxu0 %v1417
    %1715 = vmatpush2.msra.mxu0 %v1416
    %1716 = vmatprep.subr.mxu0 %v1409
    %1717 = vmatpush2.msra.mxu0 %v1408
    %1718 = vmatprep.subr.mxu0 %v1401
    %1719 = vmatpush2.msra.mxu0 %v1400
    %1720 = vmatprep.subr.mxu0 %v1393
    %1721 = vmatpush2.msra.mxu0 %v1392
    %1722 = vmatprep.subr.mxu0 %v1385
    %1723 = vmatpush2.msra.mxu0 %v1384
    %1724 = vmatprep.subr.mxu0 %v1377
    %1725 = vmatpush2.msra.mxu0 %v1376
    %1726 = vmatprep.subr.mxu0 %v1369
    %1727 = vmatpush2.msra.mxu0 %v1368
    %1728 = vmatprep.subr.mxu0 %v1361
    %1729 = vmatpush2.msra.mxu0 %v1360
    %1730 = vmatprep.subr.mxu0 %v1353
    %1731 = vmatpush2.msra.mxu0 %v1352
    %1732 = vmatprep.subr.mxu0 %v1345
    %1733 = vmatpush2.msra.mxu0 %v1344
    %1734 = vmatprep.subr.mxu0 %v1337
    %1735 = vmatpush2.msra.mxu0 %v1336
    %1736 = vmatprep.subr.mxu0 %v1329
    %1737 = vmatpush2.msra.mxu0 %v1328
    %1738 = vmatprep.subr.mxu0 %v1321
    %1739 = vmatpush2.msra.mxu0 %v1320
    %1740 = vmatprep.subr.mxu0 %v1313
    %1741 = vmatpush2.msra.mxu0 %v1312
    %1742 = vmatprep.mubr.f32.mxu0 %v1437
    %1743 = vmatmul.mubr.f32.gmra.mxu0 %v1436
    %v1744 = vpop.f32.mrf.mxu0
    %v1745 = vadd.f32 0.0, %v1744
    %v1746 = vpop.f32.mrf.mxu0
    %v1747 = vadd.f32 0.0, %v1746
    %1748 = vmatprep.mubr.f32.mxu0 %v1439
    %1749 = vmatmul.mubr.f32.gmra.mxu0 %v1438
    %v1750 = vpop.f32.mrf.mxu0
    %v1751 = vadd.f32 0.0, %v1750
    %v1752 = vpop.f32.mrf.mxu0
    %v1753 = vadd.f32 0.0, %v1752
    %1754 = vmatprep.mubr.f32.mxu0 %v1441
    %1755 = vmatmul.mubr.f32.gmra.mxu0 %v1440
    %v1756 = vpop.f32.mrf.mxu0
    %v1757 = vadd.f32 0.0, %v1756
    %v1758 = vpop.f32.mrf.mxu0
    %v1759 = vadd.f32 0.0, %v1758
    %1760 = vmatprep.mubr.f32.mxu0 %v1443
    %1761 = vmatmul.mubr.f32.gmra.mxu0 %v1442
    %v1762 = vpop.f32.mrf.mxu0
    %v1763 = vadd.f32 0.0, %v1762
    %v1764 = vpop.f32.mrf.mxu0
    %v1765 = vadd.f32 0.0, %v1764
    %1766 = vmatprep.mubr.f32.mxu0 %v1445
    %1767 = vmatmul.mubr.f32.gmra.mxu0 %v1444
    %v1768 = vpop.f32.mrf.mxu0
    %v1769 = vadd.f32 0.0, %v1768
    %v1770 = vpop.f32.mrf.mxu0
    %v1771 = vadd.f32 0.0, %v1770
    %1772 = vmatprep.mubr.f32.mxu0 %v1447
    %1773 = vmatmul.mubr.f32.gmra.mxu0 %v1446
    %v1774 = vpop.f32.mrf.mxu0
    %v1775 = vadd.f32 0.0, %v1774
    %v1776 = vpop.f32.mrf.mxu0
    %v1777 = vadd.f32 0.0, %v1776
    %1778 = vmatprep.mubr.f32.mxu0 %v1449
    %1779 = vmatmul.mubr.f32.gmra.mxu0 %v1448
    %v1780 = vpop.f32.mrf.mxu0
    %v1781 = vadd.f32 0.0, %v1780
    %v1782 = vpop.f32.mrf.mxu0
    %v1783 = vadd.f32 0.0, %v1782
    %1784 = vmatprep.mubr.f32.mxu0 %v1451
    %1785 = vmatmul.mubr.f32.gmra.mxu0 %v1450
    %v1786 = vpop.f32.mrf.mxu0
    %v1787 = vadd.f32 0.0, %v1786
    %v1788 = vpop.f32.mrf.mxu0
    %v1789 = vadd.f32 0.0, %v1788
    %1790 = vdwg.mxu0
    %1791 = vmatprep.subr.mxu0 %v1307
    %1792 = vmatpush1.msra.mxu0 %v1306
    %1793 = vmatprep.subr.mxu0 %v1299
    %1794 = vmatpush1.msra.mxu0 %v1298
    %1795 = vmatprep.subr.mxu0 %v1291
    %1796 = vmatpush1.msra.mxu0 %v1290
    %1797 = vmatprep.subr.mxu0 %v1283
    %1798 = vmatpush1.msra.mxu0 %v1282
    %1799 = vmatprep.subr.mxu0 %v1275
    %1800 = vmatpush1.msra.mxu0 %v1274
    %1801 = vmatprep.subr.mxu0 %v1267
    %1802 = vmatpush1.msra.mxu0 %v1266
    %1803 = vmatprep.subr.mxu0 %v1259
    %1804 = vmatpush1.msra.mxu0 %v1258
    %1805 = vmatprep.subr.mxu0 %v1251
    %1806 = vmatpush1.msra.mxu0 %v1250
    %1807 = vmatprep.subr.mxu0 %v1243
    %1808 = vmatpush1.msra.mxu0 %v1242
    %1809 = vmatprep.subr.mxu0 %v1235
    %1810 = vmatpush1.msra.mxu0 %v1234
    %1811 = vmatprep.subr.mxu0 %v1227
    %1812 = vmatpush1.msra.mxu0 %v1226
    %1813 = vmatprep.subr.mxu0 %v1219
    %1814 = vmatpush1.msra.mxu0 %v1218
    %1815 = vmatprep.subr.mxu0 %v1211
    %1816 = vmatpush1.msra.mxu0 %v1210
    %1817 = vmatprep.subr.mxu0 %v1203
    %1818 = vmatpush1.msra.mxu0 %v1202
    %1819 = vmatprep.subr.mxu0 %v1195
    %1820 = vmatpush1.msra.mxu0 %v1194
    %1821 = vmatprep.subr.mxu0 %v1187
    %1822 = vmatpush1.msra.mxu0 %v1186
    %1823 = vmatprep.subr.mxu0 %v1435
    %1824 = vmatpush2.msra.mxu0 %v1434
    %1825 = vmatprep.subr.mxu0 %v1427
    %1826 = vmatpush2.msra.mxu0 %v1426
    %1827 = vmatprep.subr.mxu0 %v1419
    %1828 = vmatpush2.msra.mxu0 %v1418
    %1829 = vmatprep.subr.mxu0 %v1411
    %1830 = vmatpush2.msra.mxu0 %v1410
    %1831 = vmatprep.subr.mxu0 %v1403
    %1832 = vmatpush2.msra.mxu0 %v1402
    %1833 = vmatprep.subr.mxu0 %v1395
    %1834 = vmatpush2.msra.mxu0 %v1394
    %1835 = vmatprep.subr.mxu0 %v1387
    %1836 = vmatpush2.msra.mxu0 %v1386
    %1837 = vmatprep.subr.mxu0 %v1379
    %1838 = vmatpush2.msra.mxu0 %v1378
    %1839 = vmatprep.subr.mxu0 %v1371
    %1840 = vmatpush2.msra.mxu0 %v1370
    %1841 = vmatprep.subr.mxu0 %v1363
    %1842 = vmatpush2.msra.mxu0 %v1362
    %1843 = vmatprep.subr.mxu0 %v1355
    %1844 = vmatpush2.msra.mxu0 %v1354
    %1845 = vmatprep.subr.mxu0 %v1347
    %1846 = vmatpush2.msra.mxu0 %v1346
    %1847 = vmatprep.subr.mxu0 %v1339
    %1848 = vmatpush2.msra.mxu0 %v1338
    %1849 = vmatprep.subr.mxu0 %v1331
    %1850 = vmatpush2.msra.mxu0 %v1330
    %1851 = vmatprep.subr.mxu0 %v1323
    %1852 = vmatpush2.msra.mxu0 %v1322
    %1853 = vmatprep.subr.mxu0 %v1315
    %1854 = vmatpush2.msra.mxu0 %v1314
    %1855 = vmatprep.mubr.f32.mxu0 %v1437
    %1856 = vmatmul.mubr.f32.gmra.mxu0 %v1436
    %v1857 = vpop.f32.mrf.mxu0
    %v1858 = vadd.f32 0.0, %v1857
    %v1859 = vpop.f32.mrf.mxu0
    %v1860 = vadd.f32 0.0, %v1859
    %1861 = vmatprep.mubr.f32.mxu0 %v1439
    %1862 = vmatmul.mubr.f32.gmra.mxu0 %v1438
    %v1863 = vpop.f32.mrf.mxu0
    %v1864 = vadd.f32 0.0, %v1863
    %v1865 = vpop.f32.mrf.mxu0
    %v1866 = vadd.f32 0.0, %v1865
    %1867 = vmatprep.mubr.f32.mxu0 %v1441
    %1868 = vmatmul.mubr.f32.gmra.mxu0 %v1440
    %v1869 = vpop.f32.mrf.mxu0
    %v1870 = vadd.f32 0.0, %v1869
    %v1871 = vpop.f32.mrf.mxu0
    %v1872 = vadd.f32 0.0, %v1871
    %1873 = vmatprep.mubr.f32.mxu0 %v1443
    %1874 = vmatmul.mubr.f32.gmra.mxu0 %v1442
    %v1875 = vpop.f32.mrf.mxu0
    %v1876 = vadd.f32 0.0, %v1875
    %v1877 = vpop.f32.mrf.mxu0
    %v1878 = vadd.f32 0.0, %v1877
    %1879 = vmatprep.mubr.f32.mxu0 %v1445
    %1880 = vmatmul.mubr.f32.gmra.mxu0 %v1444
    %v1881 = vpop.f32.mrf.mxu0
    %v1882 = vadd.f32 0.0, %v1881
    %v1883 = vpop.f32.mrf.mxu0
    %v1884 = vadd.f32 0.0, %v1883
    %1885 = vmatprep.mubr.f32.mxu0 %v1447
    %1886 = vmatmul.mubr.f32.gmra.mxu0 %v1446
    %v1887 = vpop.f32.mrf.mxu0
    %v1888 = vadd.f32 0.0, %v1887
    %v1889 = vpop.f32.mrf.mxu0
    %v1890 = vadd.f32 0.0, %v1889
    %1891 = vmatprep.mubr.f32.mxu0 %v1449
    %1892 = vmatmul.mubr.f32.gmra.mxu0 %v1448
    %v1893 = vpop.f32.mrf.mxu0
    %v1894 = vadd.f32 0.0, %v1893
    %v1895 = vpop.f32.mrf.mxu0
    %v1896 = vadd.f32 0.0, %v1895
    %1897 = vmatprep.mubr.f32.mxu0 %v1451
    %1898 = vmatmul.mubr.f32.gmra.mxu0 %v1450
    %v1899 = vpop.f32.mrf.mxu0
    %v1900 = vadd.f32 0.0, %v1899
    %v1901 = vpop.f32.mrf.mxu0
    %v1902 = vadd.f32 0.0, %v1901
    %1903 = vdwg.mxu0
    %v1904 = vmul.f32 %v1519, %v1543
    %v1905 = vmul.f32 %v1521, %v1545
    %v1906 = vmul.f32 %v1632, %v1656
    %v1907 = vmul.f32 %v1634, %v1658
    %v1908 = vmul.f32 %v1745, %v1769
    %v1909 = vmul.f32 %v1747, %v1771
    %v1910 = vmul.f32 %v1858, %v1882
    %v1911 = vmul.f32 %v1860, %v1884
    %v1912 = vmul.f32 %v1525, %v1549
    %v1913 = vmul.f32 %v1527, %v1551
    %v1914 = vmul.f32 %v1638, %v1662
    %v1915 = vmul.f32 %v1640, %v1664
    %v1916 = vmul.f32 %v1751, %v1775
    %v1917 = vmul.f32 %v1753, %v1777
    %v1918 = vmul.f32 %v1864, %v1888
    %v1919 = vmul.f32 %v1866, %v1890
    %v1920 = vmul.f32 %v1531, %v1555
    %v1921 = vmul.f32 %v1533, %v1557
    %v1922 = vmul.f32 %v1644, %v1668
    %v1923 = vmul.f32 %v1646, %v1670
    %v1924 = vmul.f32 %v1757, %v1781
    %v1925 = vmul.f32 %v1759, %v1783
    %v1926 = vmul.f32 %v1870, %v1894
    %v1927 = vmul.f32 %v1872, %v1896
    %v1928 = vmul.f32 %v1537, %v1561
    %v1929 = vmul.f32 %v1539, %v1563
    %v1930 = vmul.f32 %v1650, %v1674
    %v1931 = vmul.f32 %v1652, %v1676
    %v1932 = vmul.f32 %v1763, %v1787
    %v1933 = vmul.f32 %v1765, %v1789
    %v1934 = vmul.f32 %v1876, %v1900
    %v1935 = vmul.f32 %v1878, %v1902
    %v1936 = vadd.f32 %v1904, %v1912
    %v1937 = vadd.f32 %v1936, %v1920
    %v1938 = vadd.f32 %v1937, %v1928
    %v1939 = vrot.slane %v1938, 4
    %v1940 = vadd.f32 %v1938, %v1939
    %v1941 = vrot.slane %v1940, 2
    %v1942 = vadd.f32 %v1940, %v1941
    %v1943 = vrot.slane %v1942, 1
    %v1944 = vadd.f32 %v1942, %v1943
    %v1945 = vadd.f32 %v1905, %v1913
    %v1946 = vadd.f32 %v1945, %v1921
    %v1947 = vadd.f32 %v1946, %v1929
    %v1948 = vrot.slane %v1947, 4
    %v1949 = vadd.f32 %v1947, %v1948
    %v1950 = vrot.slane %v1949, 2
    %v1951 = vadd.f32 %v1949, %v1950
    %v1952 = vrot.slane %v1951, 1
    %v1953 = vadd.f32 %v1951, %v1952
    %v1954 = vadd.f32 %v1906, %v1914
    %v1955 = vadd.f32 %v1954, %v1922
    %v1956 = vadd.f32 %v1955, %v1930
    %v1957 = vrot.slane %v1956, 4
    %v1958 = vadd.f32 %v1956, %v1957
    %v1959 = vrot.slane %v1958, 2
    %v1960 = vadd.f32 %v1958, %v1959
    %v1961 = vrot.slane %v1960, 1
    %v1962 = vadd.f32 %v1960, %v1961
    %v1963 = vadd.f32 %v1907, %v1915
    %v1964 = vadd.f32 %v1963, %v1923
    %v1965 = vadd.f32 %v1964, %v1931
    %v1966 = vrot.slane %v1965, 4
    %v1967 = vadd.f32 %v1965, %v1966
    %v1968 = vrot.slane %v1967, 2
    %v1969 = vadd.f32 %v1967, %v1968
    %v1970 = vrot.slane %v1969, 1
    %v1971 = vadd.f32 %v1969, %v1970
    %v1972 = vadd.f32 %v1908, %v1916
    %v1973 = vadd.f32 %v1972, %v1924
    %v1974 = vadd.f32 %v1973, %v1932
    %v1975 = vrot.slane %v1974, 4
    %v1976 = vadd.f32 %v1974, %v1975
    %v1977 = vrot.slane %v1976, 2
    %v1978 = vadd.f32 %v1976, %v1977
    %v1979 = vrot.slane %v1978, 1
    %v1980 = vadd.f32 %v1978, %v1979
    %v1981 = vadd.f32 %v1909, %v1917
    %v1982 = vadd.f32 %v1981, %v1925
    %v1983 = vadd.f32 %v1982, %v1933
    %v1984 = vrot.slane %v1983, 4
    %v1985 = vadd.f32 %v1983, %v1984
    %v1986 = vrot.slane %v1985, 2
    %v1987 = vadd.f32 %v1985, %v1986
    %v1988 = vrot.slane %v1987, 1
    %v1989 = vadd.f32 %v1987, %v1988
    %v1990 = vadd.f32 %v1910, %v1918
    %v1991 = vadd.f32 %v1990, %v1926
    %v1992 = vadd.f32 %v1991, %v1934
    %v1993 = vrot.slane %v1992, 4
    %v1994 = vadd.f32 %v1992, %v1993
    %v1995 = vrot.slane %v1994, 2
    %v1996 = vadd.f32 %v1994, %v1995
    %v1997 = vrot.slane %v1996, 1
    %v1998 = vadd.f32 %v1996, %v1997
    %v1999 = vadd.f32 %v1911, %v1919
    %v2000 = vadd.f32 %v1999, %v1927
    %v2001 = vadd.f32 %v2000, %v1935
    %v2002 = vrot.slane %v2001, 4
    %v2003 = vadd.f32 %v2001, %v2002
    %v2004 = vrot.slane %v2003, 2
    %v2005 = vadd.f32 %v2003, %v2004
    %v2006 = vrot.slane %v2005, 1
    %v2007 = vadd.f32 %v2005, %v2006
    %s2008 = sld [smem:[#allocation2]]
    %v2009 = vstv %s2008
    %v2010 = vadd.f32 %v1944, %v2009
    %v2011 = vadd.f32 %v1953, %v2009
    %v2012 = vadd.f32 %v1962, %v2009
    %v2013 = vadd.f32 %v1971, %v2009
    %v2014 = vadd.f32 %v1980, %v2009
    %v2015 = vadd.f32 %v1989, %v2009
    %v2016 = vadd.f32 %v1998, %v2009
    %v2017 = vadd.f32 %v2007, %v2009
    %v2018 = vsub.f32 0.0, %v2010
    %v2019 = vsub.f32 0.0, %v2011
    %v2020 = vsub.f32 0.0, %v2012
    %v2021 = vsub.f32 0.0, %v2013
    %v2022 = vsub.f32 0.0, %v2014
    %v2023 = vsub.f32 0.0, %v2015
    %v2024 = vsub.f32 0.0, %v2016
    %v2025 = vsub.f32 0.0, %v2017
    %v2026 = vmul.f32 %v2018, 1.442695
    %v2027 = vpow.pop %v2026
    %v2028 = vmul.f32 %v2019, 1.442695
    %v2029 = vpow.pop %v2028
    %v2030 = vmul.f32 %v2020, 1.442695
    %v2031 = vpow.pop %v2030
    %v2032 = vmul.f32 %v2021, 1.442695
    %v2033 = vpow.pop %v2032
    %v2034 = vmul.f32 %v2022, 1.442695
    %v2035 = vpow.pop %v2034
    %v2036 = vmul.f32 %v2023, 1.442695
    %v2037 = vpow.pop %v2036
    %v2038 = vmul.f32 %v2024, 1.442695
    %v2039 = vpow.pop %v2038
    %v2040 = vmul.f32 %v2025, 1.442695
    %v2041 = vpow.pop %v2040
    %v2042 = vadd.f32 %v2027, 1.0
    %v2043 = vadd.f32 %v2029, 1.0
    %v2044 = vadd.f32 %v2031, 1.0
    %v2045 = vadd.f32 %v2033, 1.0
    %v2046 = vadd.f32 %v2035, 1.0
    %v2047 = vadd.f32 %v2037, 1.0
    %v2048 = vadd.f32 %v2039, 1.0
    %v2049 = vadd.f32 %v2041, 1.0
    %v2050 = vrcp.pop %v2042
    %v2051 = vmul.f32 1.0, %v2050
    %v2052 = vrcp.pop %v2043
    %v2053 = vmul.f32 1.0, %v2052
    %v2054 = vrcp.pop %v2044
    %v2055 = vmul.f32 1.0, %v2054
    %v2056 = vrcp.pop %v2045
    %v2057 = vmul.f32 1.0, %v2056
    %v2058 = vrcp.pop %v2046
    %v2059 = vmul.f32 1.0, %v2058
    %v2060 = vrcp.pop %v2047
    %v2061 = vmul.f32 1.0, %v2060
    %v2062 = vrcp.pop %v2048
    %v2063 = vmul.f32 1.0, %v2062
    %v2064 = vrcp.pop %v2049
    %v2065 = vmul.f32 1.0, %v2064
    %v2074 = vcombine.low %v2051, %v2053
    %v2075 = vcombine.low %v2055, %v2057
    %v2076 = vcombine.low %v2059, %v2061
    %v2077 = vcombine.low %v2063, %v2065
    %v2079 = vunpack.c.l.s4 1966171168
    %v2080 = vunpack.c.0.s8 %v2079
    %v2081 = vlaneseq
    %v2082 = vshrl.u32 %v2081, 7
    %v2083 = vsub.s32 %v2080, %v2082
    %v2084 = vrot.slane %v2074, %v2083
    %v2086 = vunpack.c.l.s4 1966171168
    %v2087 = vunpack.c.0.s8 %v2086
    %v2088 = vlaneseq
    %v2089 = vshrl.u32 %v2088, 7
    %v2090 = vsub.s32 %v2087, %v2089
    %v2091 = vrot.slane %v2075, %v2090
    %v2093 = vunpack.c.l.s4 1966171168
    %v2094 = vunpack.c.0.s8 %v2093
    %v2095 = vlaneseq
    %v2096 = vshrl.u32 %v2095, 7
    %v2097 = vsub.s32 %v2094, %v2096
    %v2098 = vrot.slane %v2076, %v2097
    %v2100 = vunpack.c.l.s4 1966171168
    %v2101 = vunpack.c.0.s8 %v2100
    %v2102 = vlaneseq
    %v2103 = vshrl.u32 %v2102, 7
    %v2104 = vsub.s32 %v2101, %v2103
    %v2105 = vrot.slane %v2077, %v2104
    %v2106 = vcombine.low %v2084, %v2091
    %v2107 = vcombine.low %v2098, %v2105
    %v2109 = vunpack.c.l.s4 1966171168
    %v2110 = vunpack.c.0.s8 %v2109
    %v2111 = vlaneseq
    %v2112 = vshrl.u32 %v2111, 7
    %v2113 = vsub.s32 %v2110, %v2112
    %v2114 = vrot.slane %v2106, %v2113
    %v2116 = vunpack.c.l.s4 1966171168
    %v2117 = vunpack.c.0.s8 %v2116
    %v2118 = vlaneseq
    %v2119 = vshrl.u32 %v2118, 7
    %v2120 = vsub.s32 %v2117, %v2119
    %v2121 = vrot.slane %v2107, %v2120
    %v2122 = vcombine.low %v2114, %v2121
    %2124 = vst [vmem:[#allocation9] sm:$0xff] %v2122
    // Predicated region
    $region30: #{tpu_custom_call.1} parent=1 // pred_check
      _
    $region31: #{tpu_custom_call.1} parent=1 // pred_check_branch
      %2126 = sbr.rel (0) target = $region33
    $region32: #{tpu_custom_call.1} parent=1 // pred_region
      %s2128 = ssub.s32 128, 128
      %2129 = vsyncadd [#allocation5], %s2128
      %s2131 = sshll.u32 [#allocation9], 4
      %s2132 = int_to_ptr.vmem [resolvable:$true] %s2131
      %2134 = dma.vmem_to_hbm [thread:$0]  %s2132, 128, %s4, [#allocation5]
    $region33: #{tpu_custom_call.1} parent=1 // pred_fallthru
      _
    // Predicated region
    $region34: #{tpu_custom_call.1} parent=1 // pred_check
      _
    $region35: #{tpu_custom_call.1} parent=1 // pred_check_branch
      %2136 = sbr.rel (0) target = $region37
    $region36: #{tpu_custom_call.1} parent=1 // pred_region
      %2137 = dma.done [#allocation5], 128
    $region37: #{tpu_custom_call.1} parent=1 // pred_fallthru
      _
    %2138 = vsyncpa [#allocation4], 1
    %2139 = vsyncpa [#allocation7], 1
    %2140 = vsyncpa [#allocation5], 1

</llo_original>
